<compile_context>
chip_gen: v7x
topology: tpu7x:2x2x1
jax: 0.10.0
libtpu: 0.0.40
codegen_flags: <defaults>
</compile_context>

<pallas_src>
import functools

import jax
import jax.numpy as jnp
from jax.experimental import pallas as pl
from jax.experimental.pallas import tpu as pltpu

EPS = 1e-5  # torch.nn.GroupNorm default eps


# ------------------------------ Pallas kernel ------------------------------ #

def _upblock_kernel(x_ref, top_ref, bot_ref, scale_ref, shift_ref, w_ref, b_ref,
                    o_ref, pad_ref, col_ref):
    """Fused GN-apply + (upsample-folded) 3x3 conv for one (sample, row-tile).

    x_ref     : (1, TR, W, Cin)        raw input rows of this tile (NHWC, f32)
    top_ref   : (1, 1, W, Cin)         row above the tile (ignored at t == 0)
    bot_ref   : (1, 1, W, Cin)         row below the tile (ignored at t == last)
    scale_ref : (1, 1, Cin)            per-sample fused GN scale  (gamma * rstd)
    shift_ref : (1, 1, Cin)            per-sample fused GN shift
    w_ref     : (9*Cin, 4*Cout)        zero-stuffed phase-folded conv weights
    b_ref     : (1, 4*Cout)            conv bias tiled over the 4 phases
    o_ref     : (1, TR*W, 4*Cout)      output slab (phases stacked on lanes)
    pad_ref   : (TR+2, W+2, Cin) VMEM  padded normalized tile (mxu dtype)
    col_ref   : (TR*W, 9*Cin)   VMEM  im2col slab (mxu dtype)
    """
    _, TR, W, Cin = x_ref.shape
    t = pl.program_id(1)
    n_t = pl.num_programs(1)
    f32 = jnp.float32

    scale = scale_ref[...].astype(f32)          # (1, 1, Cin)
    shift = shift_ref[...].astype(f32)          # (1, 1, Cin)

    # Zero only the left/right padding columns (corners included). Two tiny
    # column writes per step; everything else is fully rewritten below, which
    # keeps every grid step independent (both axes can be "parallel").
    zcol = jnp.zeros((TR + 2, 1, Cin), dtype=pad_ref.dtype)
    pad_ref[:, pl.ds(0, 1), :] = zcol
    pad_ref[:, pl.ds(W + 1, 1), :] = zcol

    # GroupNorm apply in f32, cast once at the slab write (bf16 by default).
    xb = x_ref[0].astype(f32)                                        # (TR, W, Cin)
    pad_ref[pl.ds(1, TR), pl.ds(1, W), :] = (xb * scale + shift).astype(pad_ref.dtype)

    # Top halo row: previous tile's last row, or zeros at the sample's top edge.
    @pl.when(t > 0)
    def _():
        xt = top_ref[0].astype(f32)                                  # (1, W, Cin)
        pad_ref[pl.ds(0, 1), pl.ds(1, W), :] = (xt * scale + shift).astype(pad_ref.dtype)

    @pl.when(t == 0)
    def _():
        pad_ref[pl.ds(0, 1), pl.ds(1, W), :] = jnp.zeros((1, W, Cin), pad_ref.dtype)

    # Bottom halo row: next tile's first row, or zeros at the bottom edge.
    @pl.when(t < n_t - 1)
    def _():
        xo = bot_ref[0].astype(f32)
        pad_ref[pl.ds(TR + 1, 1), pl.ds(1, W), :] = (xo * scale + shift).astype(pad_ref.dtype)

    @pl.when(t == n_t - 1)
    def _():
        pad_ref[pl.ds(TR + 1, 1), pl.ds(1, W), :] = jnp.zeros((1, W, Cin), pad_ref.dtype)

    # im2col: each 3x3 tap goes straight into its lane block of the slab
    # scratch (no per-phase concatenates, no extra copies).
    for ry in range(3):
        for rx in range(3):
            tap = pad_ref[pl.ds(ry, TR), pl.ds(rx, W), :].reshape(TR * W, Cin)
            col_ref[:, pl.ds((ry * 3 + rx) * Cin, Cin)] = tap

    # Single matmul produces all 4 upsample phases: (TR*W, 9*Cin) @ (9*Cin, 4*Cout).
    # TODO(synk): for Cin >= 128 a per-tap accumulating variant (16 matmuls with
    # K=Cin) avoids the 2.25x zero-stuffed FLOPs; not needed at these channel counts.
    acc = jnp.dot(col_ref[...], w_ref[...], preferred_element_type=jnp.float32)
    o_ref[0] = (acc + b_ref[...]).astype(o_ref.dtype)


# ------------------------------- helpers ----------------------------------- #

def _build_weight_slab(conv_w, mxu_dtype):
    """(Cout, Cin, 3, 3) torch conv weights -> zero-stuffed (9*Cin, 4*Cout) slab.

    Each output phase (dy, dx) of "nearest-x2 upsample then 3x3 conv (pad=1)"
    sees only a 2x2 window of the un-upsampled input; the 3x3 kernel folds
    (summing taps that hit the same source pixel) into a 2x2 kernel per phase.
    The 2x2 kernel of phase (dy, dx) is scattered into the 3x3-tap rows
    (dy+r, dx+c) of the slab; unused tap rows are zero.
    """
    Cout, Cin = conv_w.shape[0], conv_w.shape[1]
    w = jnp.transpose(conv_w, (2, 3, 1, 0)).astype(jnp.float32)      # (ky,kx,Cin,Cout)
    rowf = [jnp.stack([w[0], w[1] + w[2]], axis=0),                  # dy = 0
            jnp.stack([w[0] + w[1], w[2]], axis=0)]                  # dy = 1
    slab = jnp.zeros((9, Cin, 4, Cout), jnp.float32)
    for dy in range(2):
        wr = rowf[dy]                                                # (r, kx, Cin, Cout)
        colf = [jnp.stack([wr[:, 0], wr[:, 1] + wr[:, 2]], axis=1),  # dx = 0
                jnp.stack([wr[:, 0] + wr[:, 1], wr[:, 2]], axis=1)]  # dx = 1
        for dx in range(2):
            w22 = colf[dx]                                           # (r, c, Cin, Cout)
            phase = dy * 2 + dx
            for r in range(2):
                for c in range(2):
                    tap = (dy + r) * 3 + (dx + c)
                    slab = slab.at[tap, :, phase, :].set(w22[r, c])
    return slab.reshape(9 * Cin, 4 * Cout).astype(mxu_dtype)


def _pick_tile_rows(H, W, Cin, Cout, mxu_itemsize, budget_bytes=40 * 1024 * 1024):
    """Largest row tile (divisor of H, TR*W % 8 == 0) whose working set fits."""
    const = 9 * Cin * 4 * Cout * mxu_itemsize + 4 * Cout * 4
    valid = [tr for tr in range(H, 0, -1) if H % tr == 0 and (tr * W) % 8 == 0]
    if not valid:
        return H
    for tr in valid:
        per = (2 * tr * W * Cin * 4                          # input tile, 2 buffers (f32)
               + 2 * 2 * W * Cin * 4                         # halo rows, 2 buffers each
               + (tr + 2) * (W + 2) * Cin * mxu_itemsize     # padded normalized slab
               + tr * W * 9 * Cin * mxu_itemsize             # im2col slab
               + 2 * tr * W * 4 * Cout * 4)                  # output tile, 2 buffers (f32)
        if const + per <= budget_bytes:
            return tr
    return valid[-1]


# ------------------------------- wrapper ----------------------------------- #

@functools.partial(jax.jit, static_argnames=("scale_factor", "mxu_dtype", "tile_rows"))
def up_block_forward(x_nchw, gamma, beta, conv_w, conv_b, *, scale_factor=2,
                     mxu_dtype=jnp.bfloat16, tile_rows=None):
    """UpBlock forward. x_nchw: (B, Cin, H, W) -> (B, Cout, 2H, 2W)."""
    # TODO(synk): only num_groups=1 (module default) and nearest x2 upsampling
    # are implemented; other scale factors / interpolation modes need a
    # different weight fold.
    assert int(scale_factor) == 2
    B, Cin, H, W = x_nchw.shape
    Cout = conv_w.shape[0]

    itemsize = jnp.dtype(mxu_dtype).itemsize
    TR = int(tile_rows) if tile_rows is not None else _pick_tile_rows(H, W, Cin, Cout, itemsize)
    assert H % TR == 0 and (TR * W) % 8 == 0, (H, W, TR)
    n_tiles = H // TR

    # --- GroupNorm(num_groups=1) stats pre-pass: cheap XLA reduce, single pass.
    xf = x_nchw.astype(jnp.float32)
    mean = jnp.mean(xf, axis=(1, 2, 3))                              # (B,)
    var = jnp.mean(jnp.square(xf), axis=(1, 2, 3)) - jnp.square(mean)
    rstd = jax.lax.rsqrt(var + EPS)
    scale = (gamma[None, :].astype(jnp.float32) * rstd[:, None])     # (B, Cin)
    shift = beta[None, :].astype(jnp.float32) - mean[:, None] * scale
    scale3 = scale.reshape(B, 1, Cin)
    shift3 = shift.reshape(B, 1, Cin)

    # TODO(synk): the NCHW<->NHWC transposes below are extra HBM round trips;
    # drop them (and emit bf16) if the surrounding graph can speak NHWC / the
    # phase-slab layout directly.
    x = jnp.transpose(x_nchw, (0, 2, 3, 1)).astype(jnp.float32)      # (B, H, W, Cin)

    w_slab = _build_weight_slab(conv_w, mxu_dtype)                   # (9*Cin, 4*Cout)
    bias4 = jnp.tile(conv_b.astype(jnp.float32).reshape(1, Cout), (1, 4))  # (1, 4*Cout)

    # TODO(synk): the resident w_slab/bias blocks are still double-buffered by
    # the default pipeline; single-buffering them would save a weight copy of VMEM.
    out_flat = pl.pallas_call(
        _upblock_kernel,
        out_shape=jax.ShapeDtypeStruct((B, H * W, 4 * Cout), jnp.float32),
        grid=(B, n_tiles),
        in_specs=[
            # body rows of the tile
            pl.BlockSpec((1, TR, W, Cin), lambda b, t: (b, t, 0, 0)),
            # halo row above (clamped; ignored at t == 0)
            pl.BlockSpec((1, 1, W, Cin),
                         lambda b, t: (b, jnp.maximum(t * TR - 1, 0), 0, 0)),
            # halo row below (clamped; ignored at t == n_tiles - 1)
            pl.BlockSpec((1, 1, W, Cin),
                         lambda b, t: (b, jnp.minimum((t + 1) * TR, H - 1), 0, 0)),
            pl.BlockSpec((1, 1, Cin), lambda b, t: (b, 0, 0)),        # GN scale
            pl.BlockSpec((1, 1, Cin), lambda b, t: (b, 0, 0)),        # GN shift
            pl.BlockSpec((9 * Cin, 4 * Cout), lambda b, t: (0, 0)),   # resident weights
            pl.BlockSpec((1, 4 * Cout), lambda b, t: (0, 0)),         # resident bias
        ],
        out_specs=pl.BlockSpec((1, TR * W, 4 * Cout), lambda b, t: (b, t, 0)),
        scratch_shapes=[
            pltpu.VMEM((TR + 2, W + 2, Cin), mxu_dtype),   # padded normalized tile
            pltpu.VMEM((TR * W, 9 * Cin), mxu_dtype),      # im2col slab
        ],
        compiler_params=pltpu.CompilerParams(
            dimension_semantics=("parallel", "parallel"),
            vmem_limit_bytes=64 * 1024 * 1024),
    )(x, x, x, scale3, shift3, w_slab, bias4)

    # Phase interleave (pure layout plumbing): (B, H*W, 4*Cout) -> NCHW.
    out = out_flat.reshape(B, H, W, 2, 2, Cout)            # (b, i, j, dy, dx, co)
    out = jnp.transpose(out, (0, 5, 1, 3, 2, 4))           # (b, co, i, dy, j, dx)
    return out.reshape(B, Cout, 2 * H, 2 * W)


# --------------------------- pure-JAX reference ----------------------------- #

def reference_forward(x, gamma, beta, conv_w, conv_b, *, scale_factor=2):
    B, C, H, W = x.shape
    Cout = conv_w.shape[0]
    mean = jnp.mean(x, axis=(1, 2, 3), keepdims=True)
    var = jnp.mean(jnp.square(x - mean), axis=(1, 2, 3), keepdims=True)
    xn = (x - mean) * jax.lax.rsqrt(var + EPS)
    xn = xn * gamma.reshape(1, C, 1, 1) + beta.reshape(1, C, 1, 1)
    up = jnp.repeat(jnp.repeat(xn, scale_factor, axis=2), scale_factor, axis=3)
    out = jax.lax.conv_general_dilated(
        up, conv_w, window_strides=(1, 1), padding=((1, 1), (1, 1)),
        dimension_numbers=("NCHW", "OIHW", "NCHW"))
    return out + conv_b.reshape(1, Cout, 1, 1)


# ---------------------------------- main ------------------------------------ #

if __name__ == "__main__":
    B, Cin, Cout, H, W = 2, 4, 8, 16, 16

    key = jax.random.PRNGKey(0)
    kx, kg, kb, kw, kc = jax.random.split(key, 5)

    x = jax.random.normal(kx, (B, Cin, H, W), dtype=jnp.float32)
    gamma = 1.0 + 0.1 * jax.random.normal(kg, (Cin,), dtype=jnp.float32)
    beta = 0.1 * jax.random.normal(kb, (Cin,), dtype=jnp.float32)
    conv_w = 0.1 * jax.random.normal(kw, (Cout, Cin, 3, 3), dtype=jnp.float32)
    conv_b = 0.1 * jax.random.normal(kc, (Cout,), dtype=jnp.float32)

    ref = jax.block_until_ready(
        reference_forward(x, gamma, beta, conv_w, conv_b, scale_factor=2))

    # Exact path (f32 MXU operands), multi-tile rows: tight tolerance.
    out_f32 = jax.block_until_ready(
        up_block_forward(x, gamma, beta, conv_w, conv_b, scale_factor=2,
                         mxu_dtype=jnp.float32, tile_rows=4))
    assert out_f32.shape == (B, Cout, 2 * H, 2 * W), out_f32.shape
    assert jnp.allclose(out_f32, ref, atol=5e-4, rtol=5e-4), float(
        jnp.max(jnp.abs(out_f32 - ref)))

    # Fast path (bf16 slabs/weights, f32 accumulation), multi-tile rows.
    out_bf16 = jax.block_until_ready(
        up_block_forward(x, gamma, beta, conv_w, conv_b, scale_factor=2,
                         mxu_dtype=jnp.bfloat16, tile_rows=4))
    assert out_bf16.shape == (B, Cout, 2 * H, 2 * W), out_bf16.shape
    assert jnp.allclose(out_bf16, ref, atol=5e-2, rtol=5e-2), float(
        jnp.max(jnp.abs(out_bf16 - ref)))

    # Auto tile size (single row tile here) exercises the n_tiles == 1 boundary path.
    out_auto = jax.block_until_ready(
        up_block_forward(x, gamma, beta, conv_w, conv_b, scale_factor=2,
                         mxu_dtype=jnp.float32))
    assert jnp.allclose(out_auto, ref, atol=5e-4, rtol=5e-4), float(
        jnp.max(jnp.abs(out_auto - ref)))

    print("KERNEL_OK")
</pallas_src>

<mosaic_0001>
module attributes {stable_mosaic.version = 11 : i64} {
  func.func @_upblock_kernel(%arg0: i32, %arg1: i32, %arg2: memref<1x4x16x4xf32, #tpu.memory_space<vmem>>, %arg3: memref<1x1x16x4xf32, #tpu.memory_space<vmem>>, %arg4: memref<1x1x16x4xf32, #tpu.memory_space<vmem>>, %arg5: memref<1x1x4xf32, #tpu.memory_space<vmem>>, %arg6: memref<1x1x4xf32, #tpu.memory_space<vmem>>, %arg7: memref<36x32xf32, #tpu.memory_space<vmem>>, %arg8: memref<1x32xf32, #tpu.memory_space<vmem>>, %arg9: memref<1x64x32xf32, #tpu.memory_space<vmem>>, %arg10: memref<6x18x4xf32, #tpu.memory_space<vmem>>, %arg11: memref<64x36xf32, #tpu.memory_space<vmem>>) attributes {dimension_semantics = [#tpu.dimension_semantics<parallel>, #tpu.dimension_semantics<parallel>], iteration_bounds = array<i64: 2, 4>, scalar_prefetch = 0 : i64, scratch_operands = 2 : i64, tpu.core_type = #tpu.core_type<tc>, window_params = [{transform_indices = @transform_0, window_bounds = array<i64: 1, 4, 16, 4>}, {transform_indices = @transform_1, window_bounds = array<i64: 1, 1, 16, 4>}, {transform_indices = @transform_2, window_bounds = array<i64: 1, 1, 16, 4>}, {transform_indices = @transform_3, window_bounds = array<i64: 1, 1, 4>}, {transform_indices = @transform_4, window_bounds = array<i64: 1, 1, 4>}, {pipeline_mode = #tpu.pipeline_mode<synchronous>, transform_indices = @transform_5, window_bounds = array<i64: 36, 32>}, {pipeline_mode = #tpu.pipeline_mode<synchronous>, transform_indices = @transform_6, window_bounds = array<i64: 1, 32>}, {transform_indices = @transform_7, window_bounds = array<i64: 1, 64, 32>}]} {
    %c0 = arith.constant 0 : index
    %c0_0 = arith.constant 0 : index
    %c0_1 = arith.constant 0 : index
    %0 = vector.load %arg5[%c0, %c0_0, %c0_1] : memref<1x1x4xf32, #tpu.memory_space<vmem>>, vector<1x1x4xf32>
    %c0_2 = arith.constant 0 : index
    %c0_3 = arith.constant 0 : index
    %c0_4 = arith.constant 0 : index
    %1 = vector.load %arg6[%c0_2, %c0_3, %c0_4] : memref<1x1x4xf32, #tpu.memory_space<vmem>>, vector<1x1x4xf32>
    %cst = arith.constant 0.000000e+00 : f32
    %2 = vector.broadcast %cst : f32 to vector<6x1x4xf32>
    %c0_5 = arith.constant 0 : index
    %c0_6 = arith.constant 0 : index
    %c0_7 = arith.constant 0 : index
    %3 = vector.load %arg10[%c0_5, %c0_6, %c0_7] : memref<6x18x4xf32, #tpu.memory_space<vmem>>, vector<6x1x4xf32>
    tpu.vector_store %arg10[%c0_5, %c0_6, %c0_7], %2 {strides = array<i32>} : memref<6x18x4xf32, #tpu.memory_space<vmem>>, vector<6x1x4xf32>,
    %c0_8 = arith.constant 0 : index
    %c17 = arith.constant 17 : index
    %c0_9 = arith.constant 0 : index
    %4 = vector.load %arg10[%c0_8, %c17, %c0_9] : memref<6x18x4xf32, #tpu.memory_space<vmem>>, vector<6x1x4xf32>
    tpu.vector_store %arg10[%c0_8, %c17, %c0_9], %2 {strides = array<i32>} : memref<6x18x4xf32, #tpu.memory_space<vmem>>, vector<6x1x4xf32>,
    %c0_10 = arith.constant 0 : index
    %c0_11 = arith.constant 0 : index
    %c0_12 = arith.constant 0 : index
    %c0_13 = arith.constant 0 : index
    %5 = vector.load %arg2[%c0_10, %c0_11, %c0_12, %c0_13] : memref<1x4x16x4xf32, #tpu.memory_space<vmem>>, vector<1x4x16x4xf32>
    %6 = vector.shape_cast %5 : vector<1x4x16x4xf32> to vector<4x16x4xf32>
    %7 = vector.broadcast %0 : vector<1x1x4xf32> to vector<4x16x4xf32>
    %8 = arith.mulf %6, %7 : vector<4x16x4xf32>
    %9 = vector.broadcast %1 : vector<1x1x4xf32> to vector<4x16x4xf32>
    %10 = arith.addf %8, %9 : vector<4x16x4xf32>
    %c1 = arith.constant 1 : index
    %c1_14 = arith.constant 1 : index
    %c0_15 = arith.constant 0 : index
    %11 = vector.load %arg10[%c1, %c1_14, %c0_15] : memref<6x18x4xf32, #tpu.memory_space<vmem>>, vector<4x16x4xf32>
    tpu.vector_store %arg10[%c1, %c1_14, %c0_15], %10 {strides = array<i32>} : memref<6x18x4xf32, #tpu.memory_space<vmem>>, vector<4x16x4xf32>,
    %c0_i32 = arith.constant 0 : i32
    %12 = arith.cmpi sgt, %arg1, %c0_i32 : i32
    %13 = arith.extui %12 : i1 to i32
    %c0_i32_16 = arith.constant 0 : i32
    %14 = arith.cmpi ne, %13, %c0_i32_16 : i32
    scf.if %14 {
      %c0_68 = arith.constant 0 : index
      %c0_69 = arith.constant 0 : index
      %c0_70 = arith.constant 0 : index
      %c0_71 = arith.constant 0 : index
      %60 = vector.load %arg3[%c0_68, %c0_69, %c0_70, %c0_71] : memref<1x1x16x4xf32, #tpu.memory_space<vmem>>, vector<1x1x16x4xf32>
      %61 = vector.shape_cast %60 : vector<1x1x16x4xf32> to vector<1x16x4xf32>
      %62 = vector.broadcast %0 : vector<1x1x4xf32> to vector<1x16x4xf32>
      %63 = arith.mulf %61, %62 : vector<1x16x4xf32>
      %64 = vector.broadcast %1 : vector<1x1x4xf32> to vector<1x16x4xf32>
      %65 = arith.addf %63, %64 : vector<1x16x4xf32>
      %c0_72 = arith.constant 0 : index
      %c1_73 = arith.constant 1 : index
      %c0_74 = arith.constant 0 : index
      %66 = vector.load %arg10[%c0_72, %c1_73, %c0_74] : memref<6x18x4xf32, #tpu.memory_space<vmem>>, vector<1x16x4xf32>
      tpu.vector_store %arg10[%c0_72, %c1_73, %c0_74], %65 {strides = array<i32>} : memref<6x18x4xf32, #tpu.memory_space<vmem>>, vector<1x16x4xf32>,
    } else {
    }
    %c0_i32_17 = arith.constant 0 : i32
    %15 = arith.cmpi eq, %arg1, %c0_i32_17 : i32
    %16 = arith.extui %15 : i1 to i32
    %c0_i32_18 = arith.constant 0 : i32
    %17 = arith.cmpi ne, %16, %c0_i32_18 : i32
    scf.if %17 {
      %cst_68 = arith.constant 0.000000e+00 : f32
      %60 = vector.broadcast %cst_68 : f32 to vector<1x16x4xf32>
      %c0_69 = arith.constant 0 : index
      %c1_70 = arith.constant 1 : index
      %c0_71 = arith.constant 0 : index
      %61 = vector.load %arg10[%c0_69, %c1_70, %c0_71] : memref<6x18x4xf32, #tpu.memory_space<vmem>>, vector<1x16x4xf32>
      tpu.vector_store %arg10[%c0_69, %c1_70, %c0_71], %60 {strides = array<i32>} : memref<6x18x4xf32, #tpu.memory_space<vmem>>, vector<1x16x4xf32>,
    } else {
    }
    %c3_i32 = arith.constant 3 : i32
    %18 = arith.cmpi slt, %arg1, %c3_i32 : i32
    %19 = arith.extui %18 : i1 to i32
    %c0_i32_19 = arith.constant 0 : i32
    %20 = arith.cmpi ne, %19, %c0_i32_19 : i32
    scf.if %20 {
      %c0_68 = arith.constant 0 : index
      %c0_69 = arith.constant 0 : index
      %c0_70 = arith.constant 0 : index
      %c0_71 = arith.constant 0 : index
      %60 = vector.load %arg4[%c0_68, %c0_69, %c0_70, %c0_71] : memref<1x1x16x4xf32, #tpu.memory_space<vmem>>, vector<1x1x16x4xf32>
      %61 = vector.shape_cast %60 : vector<1x1x16x4xf32> to vector<1x16x4xf32>
      %62 = vector.broadcast %0 : vector<1x1x4xf32> to vector<1x16x4xf32>
      %63 = arith.mulf %61, %62 : vector<1x16x4xf32>
      %64 = vector.broadcast %1 : vector<1x1x4xf32> to vector<1x16x4xf32>
      %65 = arith.addf %63, %64 : vector<1x16x4xf32>
      %c5 = arith.constant 5 : index
      %c1_72 = arith.constant 1 : index
      %c0_73 = arith.constant 0 : index
      %66 = vector.load %arg10[%c5, %c1_72, %c0_73] : memref<6x18x4xf32, #tpu.memory_space<vmem>>, vector<1x16x4xf32>
      tpu.vector_store %arg10[%c5, %c1_72, %c0_73], %65 {strides = array<i32>} : memref<6x18x4xf32, #tpu.memory_space<vmem>>, vector<1x16x4xf32>,
    } else {
    }
    %c3_i32_20 = arith.constant 3 : i32
    %21 = arith.cmpi eq, %arg1, %c3_i32_20 : i32
    %22 = arith.extui %21 : i1 to i32
    %c0_i32_21 = arith.constant 0 : i32
    %23 = arith.cmpi ne, %22, %c0_i32_21 : i32
    scf.if %23 {
      %cst_68 = arith.constant 0.000000e+00 : f32
      %60 = vector.broadcast %cst_68 : f32 to vector<1x16x4xf32>
      %c5 = arith.constant 5 : index
      %c1_69 = arith.constant 1 : index
      %c0_70 = arith.constant 0 : index
      %61 = vector.load %arg10[%c5, %c1_69, %c0_70] : memref<6x18x4xf32, #tpu.memory_space<vmem>>, vector<1x16x4xf32>
      tpu.vector_store %arg10[%c5, %c1_69, %c0_70], %60 {strides = array<i32>} : memref<6x18x4xf32, #tpu.memory_space<vmem>>, vector<1x16x4xf32>,
    } else {
    }
    %c0_22 = arith.constant 0 : index
    %c0_23 = arith.constant 0 : index
    %c0_24 = arith.constant 0 : index
    %24 = vector.load %arg10[%c0_22, %c0_23, %c0_24] : memref<6x18x4xf32, #tpu.memory_space<vmem>>, vector<4x16x4xf32>
    %25 = vector.shape_cast %24 : vector<4x16x4xf32> to vector<64x4xf32>
    %c0_25 = arith.constant 0 : index
    %c0_26 = arith.constant 0 : index
    %26 = vector.load %arg11[%c0_25, %c0_26] : memref<64x36xf32, #tpu.memory_space<vmem>>, vector<64x4xf32>
    tpu.vector_store %arg11[%c0_25, %c0_26], %25 {strides = array<i32>} : memref<64x36xf32, #tpu.memory_space<vmem>>, vector<64x4xf32>,
    %c0_27 = arith.constant 0 : index
    %c1_28 = arith.constant 1 : index
    %c0_29 = arith.constant 0 : index
    %27 = vector.load %arg10[%c0_27, %c1_28, %c0_29] : memref<6x18x4xf32, #tpu.memory_space<vmem>>, vector<4x16x4xf32>
    %28 = vector.shape_cast %27 : vector<4x16x4xf32> to vector<64x4xf32>
    %c0_30 = arith.constant 0 : index
    %c4 = arith.constant 4 : index
    %29 = vector.load %arg11[%c0_30, %c4] : memref<64x36xf32, #tpu.memory_space<vmem>>, vector<64x4xf32>
    tpu.vector_store %arg11[%c0_30, %c4], %28 {strides = array<i32>} : memref<64x36xf32, #tpu.memory_space<vmem>>, vector<64x4xf32>,
    %c0_31 = arith.constant 0 : index
    %c2 = arith.constant 2 : index
    %c0_32 = arith.constant 0 : index
    %30 = vector.load %arg10[%c0_31, %c2, %c0_32] : memref<6x18x4xf32, #tpu.memory_space<vmem>>, vector<4x16x4xf32>
    %31 = vector.shape_cast %30 : vector<4x16x4xf32> to vector<64x4xf32>
    %c0_33 = arith.constant 0 : index
    %c8 = arith.constant 8 : index
    %32 = vector.load %arg11[%c0_33, %c8] : memref<64x36xf32, #tpu.memory_space<vmem>>, vector<64x4xf32>
    tpu.vector_store %arg11[%c0_33, %c8], %31 {strides = array<i32>} : memref<64x36xf32, #tpu.memory_space<vmem>>, vector<64x4xf32>,
    %c1_34 = arith.constant 1 : index
    %c0_35 = arith.constant 0 : index
    %c0_36 = arith.constant 0 : index
    %33 = vector.load %arg10[%c1_34, %c0_35, %c0_36] : memref<6x18x4xf32, #tpu.memory_space<vmem>>, vector<4x16x4xf32>
    %34 = vector.shape_cast %33 : vector<4x16x4xf32> to vector<64x4xf32>
    %c0_37 = arith.constant 0 : index
    %c12 = arith.constant 12 : index
    %35 = vector.load %arg11[%c0_37, %c12] : memref<64x36xf32, #tpu.memory_space<vmem>>, vector<64x4xf32>
    tpu.vector_store %arg11[%c0_37, %c12], %34 {strides = array<i32>} : memref<64x36xf32, #tpu.memory_space<vmem>>, vector<64x4xf32>,
    %c1_38 = arith.constant 1 : index
    %c1_39 = arith.constant 1 : index
    %c0_40 = arith.constant 0 : index
    %36 = vector.load %arg10[%c1_38, %c1_39, %c0_40] : memref<6x18x4xf32, #tpu.memory_space<vmem>>, vector<4x16x4xf32>
    %37 = vector.shape_cast %36 : vector<4x16x4xf32> to vector<64x4xf32>
    %c0_41 = arith.constant 0 : index
    %c16 = arith.constant 16 : index
    %38 = vector.load %arg11[%c0_41, %c16] : memref<64x36xf32, #tpu.memory_space<vmem>>, vector<64x4xf32>
    tpu.vector_store %arg11[%c0_41, %c16], %37 {strides = array<i32>} : memref<64x36xf32, #tpu.memory_space<vmem>>, vector<64x4xf32>,
    %c1_42 = arith.constant 1 : index
    %c2_43 = arith.constant 2 : index
    %c0_44 = arith.constant 0 : index
    %39 = vector.load %arg10[%c1_42, %c2_43, %c0_44] : memref<6x18x4xf32, #tpu.memory_space<vmem>>, vector<4x16x4xf32>
    %40 = vector.shape_cast %39 : vector<4x16x4xf32> to vector<64x4xf32>
    %c0_45 = arith.constant 0 : index
    %c20 = arith.constant 20 : index
    %41 = vector.load %arg11[%c0_45, %c20] : memref<64x36xf32, #tpu.memory_space<vmem>>, vector<64x4xf32>
    tpu.vector_store %arg11[%c0_45, %c20], %40 {strides = array<i32>} : memref<64x36xf32, #tpu.memory_space<vmem>>, vector<64x4xf32>,
    %c2_46 = arith.constant 2 : index
    %c0_47 = arith.constant 0 : index
    %c0_48 = arith.constant 0 : index
    %42 = vector.load %arg10[%c2_46, %c0_47, %c0_48] : memref<6x18x4xf32, #tpu.memory_space<vmem>>, vector<4x16x4xf32>
    %43 = vector.shape_cast %42 : vector<4x16x4xf32> to vector<64x4xf32>
    %c0_49 = arith.constant 0 : index
    %c24 = arith.constant 24 : index
    %44 = vector.load %arg11[%c0_49, %c24] : memref<64x36xf32, #tpu.memory_space<vmem>>, vector<64x4xf32>
    tpu.vector_store %arg11[%c0_49, %c24], %43 {strides = array<i32>} : memref<64x36xf32, #tpu.memory_space<vmem>>, vector<64x4xf32>,
    %c2_50 = arith.constant 2 : index
    %c1_51 = arith.constant 1 : index
    %c0_52 = arith.constant 0 : index
    %45 = vector.load %arg10[%c2_50, %c1_51, %c0_52] : memref<6x18x4xf32, #tpu.memory_space<vmem>>, vector<4x16x4xf32>
    %46 = vector.shape_cast %45 : vector<4x16x4xf32> to vector<64x4xf32>
    %c0_53 = arith.constant 0 : index
    %c28 = arith.constant 28 : index
    %47 = vector.load %arg11[%c0_53, %c28] : memref<64x36xf32, #tpu.memory_space<vmem>>, vector<64x4xf32>
    tpu.vector_store %arg11[%c0_53, %c28], %46 {strides = array<i32>} : memref<64x36xf32, #tpu.memory_space<vmem>>, vector<64x4xf32>,
    %c2_54 = arith.constant 2 : index
    %c2_55 = arith.constant 2 : index
    %c0_56 = arith.constant 0 : index
    %48 = vector.load %arg10[%c2_54, %c2_55, %c0_56] : memref<6x18x4xf32, #tpu.memory_space<vmem>>, vector<4x16x4xf32>
    %49 = vector.shape_cast %48 : vector<4x16x4xf32> to vector<64x4xf32>
    %c0_57 = arith.constant 0 : index
    %c32 = arith.constant 32 : index
    %50 = vector.load %arg11[%c0_57, %c32] : memref<64x36xf32, #tpu.memory_space<vmem>>, vector<64x4xf32>
    tpu.vector_store %arg11[%c0_57, %c32], %49 {strides = array<i32>} : memref<64x36xf32, #tpu.memory_space<vmem>>, vector<64x4xf32>,
    %c0_58 = arith.constant 0 : index
    %c0_59 = arith.constant 0 : index
    %51 = vector.load %arg11[%c0_58, %c0_59] : memref<64x36xf32, #tpu.memory_space<vmem>>, vector<64x36xf32>
    %c0_60 = arith.constant 0 : index
    %c0_61 = arith.constant 0 : index
    %52 = vector.load %arg7[%c0_60, %c0_61] : memref<36x32xf32, #tpu.memory_space<vmem>>, vector<36x32xf32>
    %cst_62 = arith.constant dense<0.000000e+00> : vector<64x32xf32>
    %53 = tpu.matmul %51, %52, %cst_62 {dimension_numbers = #tpu.dot_dimension_numbers<[1], [0], [0], [1], [0, 0, 1, 1], [], []>} : vector<64x36xf32>, vector<36x32xf32>, vector<64x32xf32> -> vector<64x32xf32>
    %c0_63 = arith.constant 0 : index
    %c0_64 = arith.constant 0 : index
    %54 = vector.load %arg8[%c0_63, %c0_64] : memref<1x32xf32, #tpu.memory_space<vmem>>, vector<1x32xf32>
    %55 = vector.broadcast %54 : vector<1x32xf32> to vector<64x32xf32>
    %56 = arith.addf %53, %55 : vector<64x32xf32>
    %c0_65 = arith.constant 0 : index
    %c0_66 = arith.constant 0 : index
    %c0_67 = arith.constant 0 : index
    %57 = vector.load %arg9[%c0_65, %c0_66, %c0_67] : memref<1x64x32xf32, #tpu.memory_space<vmem>>, vector<1x64x32xf32>
    %58 = vector.shape_cast %57 : vector<1x64x32xf32> to vector<64x32xf32>
    %59 = vector.shape_cast %56 : vector<64x32xf32> to vector<1x64x32xf32>
    tpu.vector_store %arg9[%c0_65, %c0_66, %c0_67], %59 {strides = array<i32>} : memref<1x64x32xf32, #tpu.memory_space<vmem>>, vector<1x64x32xf32>,
    return
  }
  func.func @transform_0(%arg0: i32, %arg1: i32) -> (i32, i32, i32, i32) {
    %c0_i32 = arith.constant 0 : i32
    %c0_i32_0 = arith.constant 0 : i32
    %c0_i32_1 = arith.constant 0 : i32
    return %arg0, %arg1, %c0_i32, %c0_i32_0 : i32, i32, i32, i32
  }
  func.func @transform_1(%arg0: i32, %arg1: i32) -> (i32, i32, i32, i32) {
    %c4_i32 = arith.constant 4 : i32
    %0 = arith.muli %arg1, %c4_i32 : i32
    %c1_i32 = arith.constant 1 : i32
    %1 = arith.subi %0, %c1_i32 : i32
    %c0_i32 = arith.constant 0 : i32
    %2 = arith.maxsi %1, %c0_i32 : i32
    %c0_i32_0 = arith.constant 0 : i32
    %c0_i32_1 = arith.constant 0 : i32
    %c0_i32_2 = arith.constant 0 : i32
    return %arg0, %2, %c0_i32_0, %c0_i32_1 : i32, i32, i32, i32
  }
  func.func @transform_2(%arg0: i32, %arg1: i32) -> (i32, i32, i32, i32) {
    %c1_i32 = arith.constant 1 : i32
    %0 = arith.addi %arg1, %c1_i32 : i32
    %c4_i32 = arith.constant 4 : i32
    %1 = arith.muli %0, %c4_i32 : i32
    %c15_i32 = arith.constant 15 : i32
    %2 = arith.minsi %1, %c15_i32 : i32
    %c0_i32 = arith.constant 0 : i32
    %c0_i32_0 = arith.constant 0 : i32
    %c0_i32_1 = arith.constant 0 : i32
    return %arg0, %2, %c0_i32, %c0_i32_0 : i32, i32, i32, i32
  }
  func.func @transform_3(%arg0: i32, %arg1: i32) -> (i32, i32, i32) {
    %c0_i32 = arith.constant 0 : i32
    %c0_i32_0 = arith.constant 0 : i32
    %c0_i32_1 = arith.constant 0 : i32
    return %arg0, %c0_i32, %c0_i32_0 : i32, i32, i32
  }
  func.func @transform_4(%arg0: i32, %arg1: i32) -> (i32, i32, i32) {
    %c0_i32 = arith.constant 0 : i32
    %c0_i32_0 = arith.constant 0 : i32
    %c0_i32_1 = arith.constant 0 : i32
    return %arg0, %c0_i32, %c0_i32_0 : i32, i32, i32
  }
  func.func @transform_5(%arg0: i32, %arg1: i32) -> (i32, i32) {
    %c0_i32 = arith.constant 0 : i32
    %c0_i32_0 = arith.constant 0 : i32
    %c0_i32_1 = arith.constant 0 : i32
    return %c0_i32, %c0_i32_0 : i32, i32
  }
  func.func @transform_6(%arg0: i32, %arg1: i32) -> (i32, i32) {
    %c0_i32 = arith.constant 0 : i32
    %c0_i32_0 = arith.constant 0 : i32
    %c0_i32_1 = arith.constant 0 : i32
    return %c0_i32, %c0_i32_0 : i32, i32
  }
  func.func @transform_7(%arg0: i32, %arg1: i32) -> (i32, i32, i32) {
    %c0_i32 = arith.constant 0 : i32
    %c0_i32_0 = arith.constant 0 : i32
    return %arg0, %arg1, %c0_i32 : i32, i32, i32
  }
}

</mosaic_0001>

<llo_original>
// kernel: up_block_forward.1
$region0: #{up_block_forward.1}
  #allocation0 [shape = 'u32[]', space=smem, size = 0x4, offset = 0x4, fixed_abs, tag = 'smem constant byte address 0x4 - core index']
  #allocation1 [shape = 'u32[144,128]{1,0:T(1,128)}', space=vmem, size = 0x12000, scoped, tag = 'internal scratch']
  #allocation2 [shape = 'f32[6,18,4]{2,1,0:T(8,128)}', space=vmem, size = 0x12000, scoped, tag = 'scratch operand']
  #allocation3 [shape = 'f32[64,36]{1,0:T(8,128)}', space=vmem, size = 0x8000, scoped, tag = 'scratch operand']
  %s0 = inlined_call_operand.hbm [shape: f32[2,16,16,4], index: 0, kind: input, shape index: {}, may-alias: {0,1,2}]
  %s1 = inlined_call_operand.hbm [shape: f32[2,16,16,4], index: 1, kind: input, shape index: {}, may-alias: {0,1,2}]
  %s2 = inlined_call_operand.hbm [shape: f32[2,16,16,4], index: 2, kind: input, shape index: {}, may-alias: {0,1,2}]
  %s3 = inlined_call_operand.hbm [shape: f32[2,1,4], index: 3, kind: input, shape index: {}]
  %s4 = inlined_call_operand.hbm [shape: f32[2,1,4], index: 4, kind: input, shape index: {}]
  %s5 = inlined_call_operand.hbm [shape: f32[36,32], index: 5, kind: input, shape index: {}]
  %s6 = inlined_call_operand.hbm [shape: f32[1,32], index: 6, kind: input, shape index: {}]
  %s7 = inlined_call_operand.hbm [shape: f32[2,256,32], index: 7, kind: output, shape index: {}]
  %s8 = sld [smem:[#allocation0]]
  $region105: #{up_block_forward.1} parent=0
    _
  %s10 = ssub.s32 1, %s8
  %s11 = scalar_select 0, %s10, %s8
  $region1: #{up_block_forward.1} parent=0
    #allocation4 [shape = 'u8[65536]{0}', space=vmem, size = 0x10000, scoped, tag = 'input window, operand 0']
    #allocation5 [shape = 's32[2]{0}', space=sflag, size = 0x8, scoped, tag = 'scoped memory for up_block_forward.1']
    #allocation6 [shape = 's32[2]{0}', space=sflag, size = 0x8, scoped, tag = 'scoped memory for up_block_forward.1']
    #allocation7 [shape = 'u8[16384]{0}', space=vmem, size = 0x4000, scoped, tag = 'input window, operand 1']
    #allocation8 [shape = 's32[2]{0}', space=sflag, size = 0x8, scoped, tag = 'scoped memory for up_block_forward.1']
    #allocation9 [shape = 'u8[16384]{0}', space=vmem, size = 0x4000, scoped, tag = 'input window, operand 2']
    #allocation10 [shape = 'u8[1024]{0}', space=vmem, size = 0x400, scoped, tag = 'input window, operand 3']
    #allocation11 [shape = 's32[2]{0}', space=sflag, size = 0x8, scoped, tag = 'scoped memory for up_block_forward.1']
    #allocation12 [shape = 'u8[1024]{0}', space=vmem, size = 0x400, scoped, tag = 'input window, operand 4']
    #allocation13 [shape = 'u8[20480]{0}', space=vmem, size = 0x5000, scoped, tag = 'input window, operand 5, single buffered']
    #allocation14 [shape = 's32[1]{0}', space=sflag, size = 0x4, scoped, tag = 'scoped memory for up_block_forward.1']
    #allocation15 [shape = 'u8[512]{0}', space=vmem, size = 0x400, scoped, tag = 'input window, operand 6, single buffered']
    #allocation16 [shape = 'u8[65536]{0}', space=vmem, size = 0x10000, scoped, tag = 'output window, operand 0']
    %12 = vsyncpa [#allocation5], 0
    %s13 = scalar_lea.sflag [#allocation5], 1
    %14 = vsyncpa %s13, 0
    %15 = vsyncpa [#allocation8], 0
    %s16 = scalar_lea.sflag [#allocation8], 1
    %17 = vsyncpa %s16, 0
    %18 = vsyncpa [#allocation11], 0
    %s19 = scalar_lea.sflag [#allocation11], 1
    %20 = vsyncpa %s19, 0
    %21 = vsyncpa [#allocation14], 0
    %22 = vsyncpa [#allocation6], 0
    %s23 = scalar_lea.sflag [#allocation6], 1
    %24 = vsyncpa %s23, 0
    loop: start=0, step=1, limit=10
    $region2: #{up_block_forward.1} parent=1 // loop_pre_header
      _
    $region3: #{up_block_forward.1} parent=1 // loop_header
      %s26 = sphi 0, %s30
      %p27 = scmp.ge.s32.totalorder %s26, 10
      %s33 = sphi 0, %s45
      %s34 = sphi 0, %s41
      %s35 = sphi 0, %s33
      %s36 = sphi 0, %s34
      %s37 = sphi 0, %s35
      %s38 = sphi 0, %s36
      %s50 = sphi 0, %s52
      %s53 = sphi 0, %s50
      %s54 = sphi 0, %s53
      %s70 = sphi 0, %s54
      %s86 = sphi 0, %s88
      %s89 = sphi 0, %s86
      %s90 = sphi 0, %s89
      %s106 = sphi 0, %s90
      %s122 = sphi 0, %s124
      %s125 = sphi 0, %s122
      %s126 = sphi 0, %s125
      %s142 = sphi 0, %s126
      %s148 = sphi 0, %s150
      %s151 = sphi 0, %s148
      %s152 = sphi 0, %s151
      %s168 = sphi 0, %s152
      %s174 = sphi 0, %s176
      %s177 = sphi 0, %s174
      %s178 = sphi 0, %s177
      %s194 = sphi 0, %s178
      %s198 = sphi 0, %s198
      %s200 = sphi 0, %s198
      %s201 = sphi 0, %s200
      %s215 = sphi 0, %s201
      %s219 = sphi 0, %s219
      %s221 = sphi 0, %s219
      %s222 = sphi 0, %s221
      %s236 = sphi 0, %s222
      %s244 = sphi 0, %s246
      %s247 = sphi 0, %s244
      %s248 = sphi 0, %s247
      %s264 = sphi 0, %s248
    $region4: #{up_block_forward.1} parent=1 // loop_header_branch
      %29 = sbr.rel (%p27) target = $region8
    $region5: #{up_block_forward.1} parent=1 // loop_body
      %s31 = ssub.s32 %s26, 1
      %s32 = ssub.s32 %s26, 2
      %s39 = sadd.s32 1, %s34
      %p40 = scmp.ge.s32.totalorder %s39, 4
      %s41 = scalar_select %p40, 0, %s39
      %s42 = sadd.s32 1, %s33
      %s43 = scalar_select %p40, %s42, %s33
      %p44 = scmp.ge.s32.totalorder %s43, 2
      %s45 = scalar_select %p44, 0, %s43
      %s46 = ssub.s32 %s33, %s45
      %s47 = ssub.s32 %s34, %s41
      %s48 = sor.u32 %s46, %s47
      %p49 = scmp.eq.s32.totalorder %s48, 0
      %s51 = sadd.s32 %s50, 1
      %s52 = scalar_select %p49, %s50, %s51
      %p55 = pneg %p49
      %p56 = scmp.eq.s32.totalorder %s26, 7
      %p57 = por %p55, %p56
      %p58 = scmp.ne.s32.totalorder %s50, %s53
      %p59 = scmp.eq.s32.totalorder %s26, 0
      %p60 = por %p58, %p59
      %p61 = scmp.ne.s32.totalorder %s50, %s53
      %p62 = scmp.eq.s32.totalorder %s31, 7
      %p63 = por %p61, %p62
      %p64 = scmp.ne.s32.totalorder %s53, %s54
      %p65 = scmp.eq.s32.totalorder %s31, 0
      %p66 = por %p64, %p65
      %p67 = scmp.ne.s32.totalorder %s53, %s54
      %p68 = scmp.eq.s32.totalorder %s32, 7
      %p69 = por %p67, %p68
      %p71 = scmp.ne.s32.totalorder %s54, %s70
      %p72 = scmp.eq.s32.totalorder %s32, 0
      %p73 = por %p71, %p72
      %s74 = smul.u32 %s34, 4
      %s75 = ssub.s32 %s74, 1
      %p76 = scmp.gt.s32.totalorder %s75, 0
      %s77 = scalar_select %p76, %s75, 0
      %s78 = smul.u32 %s41, 4
      %s79 = ssub.s32 %s78, 1
      %p80 = scmp.gt.s32.totalorder %s79, 0
      %s81 = scalar_select %p80, %s79, 0
      %s82 = ssub.s32 %s33, %s45
      %s83 = ssub.s32 %s77, %s81
      %s84 = sor.u32 %s82, %s83
      %p85 = scmp.eq.s32.totalorder %s84, 0
      %s87 = sadd.s32 %s86, 1
      %s88 = scalar_select %p85, %s86, %s87
      %p91 = pneg %p85
      %p92 = scmp.eq.s32.totalorder %s26, 7
      %p93 = por %p91, %p92
      %p94 = scmp.ne.s32.totalorder %s86, %s89
      %p95 = scmp.eq.s32.totalorder %s26, 0
      %p96 = por %p94, %p95
      %p97 = scmp.ne.s32.totalorder %s86, %s89
      %p98 = scmp.eq.s32.totalorder %s31, 7
      %p99 = por %p97, %p98
      %p100 = scmp.ne.s32.totalorder %s89, %s90
      %p101 = scmp.eq.s32.totalorder %s31, 0
      %p102 = por %p100, %p101
      %p103 = scmp.ne.s32.totalorder %s89, %s90
      %p104 = scmp.eq.s32.totalorder %s32, 7
      %p105 = por %p103, %p104
      %p107 = scmp.ne.s32.totalorder %s90, %s106
      %p108 = scmp.eq.s32.totalorder %s32, 0
      %p109 = por %p107, %p108
      %s110 = sadd.s32 %s34, 1
      %s111 = smul.u32 %s110, 4
      %p112 = scmp.lt.s32.totalorder %s111, 15
      %s113 = scalar_select %p112, %s111, 15
      %s114 = sadd.s32 %s41, 1
      %s115 = smul.u32 %s114, 4
      %p116 = scmp.lt.s32.totalorder %s115, 15
      %s117 = scalar_select %p116, %s115, 15
      %s118 = ssub.s32 %s33, %s45
      %s119 = ssub.s32 %s113, %s117
      %s120 = sor.u32 %s118, %s119
      %p121 = scmp.eq.s32.totalorder %s120, 0
      %s123 = sadd.s32 %s122, 1
      %s124 = scalar_select %p121, %s122, %s123
      %p127 = pneg %p121
      %p128 = scmp.eq.s32.totalorder %s26, 7
      %p129 = por %p127, %p128
      %p130 = scmp.ne.s32.totalorder %s122, %s125
      %p131 = scmp.eq.s32.totalorder %s26, 0
      %p132 = por %p130, %p131
      %p133 = scmp.ne.s32.totalorder %s122, %s125
      %p134 = scmp.eq.s32.totalorder %s31, 7
      %p135 = por %p133, %p134
      %p136 = scmp.ne.s32.totalorder %s125, %s126
      %p137 = scmp.eq.s32.totalorder %s31, 0
      %p138 = por %p136, %p137
      %p139 = scmp.ne.s32.totalorder %s125, %s126
      %p140 = scmp.eq.s32.totalorder %s32, 7
      %p141 = por %p139, %p140
      %p143 = scmp.ne.s32.totalorder %s126, %s142
      %p144 = scmp.eq.s32.totalorder %s32, 0
      %p145 = por %p143, %p144
      %s146 = ssub.s32 %s33, %s45
      %p147 = scmp.eq.s32.totalorder %s146, 0
      %s149 = sadd.s32 %s148, 1
      %s150 = scalar_select %p147, %s148, %s149
      %p153 = pneg %p147
      %p154 = scmp.eq.s32.totalorder %s26, 7
      %p155 = por %p153, %p154
      %p156 = scmp.ne.s32.totalorder %s148, %s151
      %p157 = scmp.eq.s32.totalorder %s26, 0
      %p158 = por %p156, %p157
      %p159 = scmp.ne.s32.totalorder %s148, %s151
      %p160 = scmp.eq.s32.totalorder %s31, 7
      %p161 = por %p159, %p160
      %p162 = scmp.ne.s32.totalorder %s151, %s152
      %p163 = scmp.eq.s32.totalorder %s31, 0
      %p164 = por %p162, %p163
      %p165 = scmp.ne.s32.totalorder %s151, %s152
      %p166 = scmp.eq.s32.totalorder %s32, 7
      %p167 = por %p165, %p166
      %p169 = scmp.ne.s32.totalorder %s152, %s168
      %p170 = scmp.eq.s32.totalorder %s32, 0
      %p171 = por %p169, %p170
      %s172 = ssub.s32 %s33, %s45
      %p173 = scmp.eq.s32.totalorder %s172, 0
      %s175 = sadd.s32 %s174, 1
      %s176 = scalar_select %p173, %s174, %s175
      %p179 = pneg %p173
      %p180 = scmp.eq.s32.totalorder %s26, 7
      %p181 = por %p179, %p180
      %p182 = scmp.ne.s32.totalorder %s174, %s177
      %p183 = scmp.eq.s32.totalorder %s26, 0
      %p184 = por %p182, %p183
      %p185 = scmp.ne.s32.totalorder %s174, %s177
      %p186 = scmp.eq.s32.totalorder %s31, 7
      %p187 = por %p185, %p186
      %p188 = scmp.ne.s32.totalorder %s177, %s178
      %p189 = scmp.eq.s32.totalorder %s31, 0
      %p190 = por %p188, %p189
      %p191 = scmp.ne.s32.totalorder %s177, %s178
      %p192 = scmp.eq.s32.totalorder %s32, 7
      %p193 = por %p191, %p192
      %p195 = scmp.ne.s32.totalorder %s178, %s194
      %p196 = scmp.eq.s32.totalorder %s32, 0
      %p197 = por %p195, %p196
      %s199 = sadd.s32 %s198, 1
      %p202 = scmp.eq.s32.totalorder %s26, 7
      %p203 = scmp.ne.s32.totalorder %s198, %s200
      %p204 = scmp.eq.s32.totalorder %s26, 0
      %p205 = por %p203, %p204
      %p206 = scmp.ne.s32.totalorder %s198, %s200
      %p207 = scmp.eq.s32.totalorder %s31, 7
      %p208 = por %p206, %p207
      %p209 = scmp.ne.s32.totalorder %s200, %s201
      %p210 = scmp.eq.s32.totalorder %s31, 0
      %p211 = por %p209, %p210
      %p212 = scmp.ne.s32.totalorder %s200, %s201
      %p213 = scmp.eq.s32.totalorder %s32, 7
      %p214 = por %p212, %p213
      %p216 = scmp.ne.s32.totalorder %s201, %s215
      %p217 = scmp.eq.s32.totalorder %s32, 0
      %p218 = por %p216, %p217
      %s220 = sadd.s32 %s219, 1
      %p223 = scmp.eq.s32.totalorder %s26, 7
      %p224 = scmp.ne.s32.totalorder %s219, %s221
      %p225 = scmp.eq.s32.totalorder %s26, 0
      %p226 = por %p224, %p225
      %p227 = scmp.ne.s32.totalorder %s219, %s221
      %p228 = scmp.eq.s32.totalorder %s31, 7
      %p229 = por %p227, %p228
      %p230 = scmp.ne.s32.totalorder %s221, %s222
      %p231 = scmp.eq.s32.totalorder %s31, 0
      %p232 = por %p230, %p231
      %p233 = scmp.ne.s32.totalorder %s221, %s222
      %p234 = scmp.eq.s32.totalorder %s32, 7
      %p235 = por %p233, %p234
      %p237 = scmp.ne.s32.totalorder %s222, %s236
      %p238 = scmp.eq.s32.totalorder %s32, 0
      %p239 = por %p237, %p238
      %s240 = ssub.s32 %s33, %s45
      %s241 = ssub.s32 %s34, %s41
      %s242 = sor.u32 %s240, %s241
      %p243 = scmp.eq.s32.totalorder %s242, 0
      %s245 = sadd.s32 %s244, 1
      %s246 = scalar_select %p243, %s244, %s245
      %p249 = pneg %p243
      %p250 = scmp.eq.s32.totalorder %s26, 7
      %p251 = por %p249, %p250
      %p252 = scmp.ne.s32.totalorder %s244, %s247
      %p253 = scmp.eq.s32.totalorder %s26, 0
      %p254 = por %p252, %p253
      %p255 = scmp.ne.s32.totalorder %s244, %s247
      %p256 = scmp.eq.s32.totalorder %s31, 7
      %p257 = por %p255, %p256
      %p258 = scmp.ne.s32.totalorder %s247, %s248
      %p259 = scmp.eq.s32.totalorder %s31, 0
      %p260 = por %p258, %p259
      %p261 = scmp.ne.s32.totalorder %s247, %s248
      %p262 = scmp.eq.s32.totalorder %s32, 7
      %p263 = por %p261, %p262
      %p265 = scmp.ne.s32.totalorder %s248, %s264
      %p266 = scmp.eq.s32.totalorder %s32, 0
      %p267 = por %p265, %p266
      %p268 = scmp.le.s32.totalorder 1, %s26
      %p269 = scmp.lt.s32.totalorder %s26, 9
      %p270 = pnand %p268, %p269
      %p271 = pneg %p270
      // Predicated region
      $region9: #{up_block_forward.1} parent=5 // pred_check
        _
      $region10: #{up_block_forward.1} parent=5 // pred_check_branch
        %273 = sbr.rel (%p270) target = $region12
      $region11: #{up_block_forward.1} parent=5 // pred_region
        %s274 = ssub.s32 %s26, 1
        // Predicated region
        $region13: #{up_block_forward.1} parent=11 // pred_check
          %p275 = pneg %p211
        $region14: #{up_block_forward.1} parent=11 // pred_check_branch
          %277 = sbr.rel (%p275) target = $region16
        $region15: #{up_block_forward.1} parent=11 // pred_region
          %s279 = ssub.s32 640, 640
          %280 = vsyncadd [#allocation14], %s279
          %s281 = sshll.u32 [#allocation13], 4
          %s282 = int_to_ptr.vmem [resolvable:$true] %s281
          %287 = dma.hbm_to_vmem [thread:$0]  %s5, 640, %s282, [#allocation14], 128, 128, 8
        $region16: #{up_block_forward.1} parent=11 // pred_fallthru
          _
        // Predicated region
        $region17: #{up_block_forward.1} parent=11 // pred_check
          %p288 = pneg %p232
        $region18: #{up_block_forward.1} parent=11 // pred_check_branch
          %290 = sbr.rel (%p288) target = $region20
        $region19: #{up_block_forward.1} parent=11 // pred_region
          %s292 = ssub.s32 16, 16
          %293 = vsyncadd [#allocation14], %s292
          %s295 = sshll.u32 [#allocation15], 4
          %s296 = int_to_ptr.vmem [resolvable:$true] %s295
          %298 = dma.hbm_to_vmem [thread:$0]  %s6, 16, %s296, [#allocation14]
        $region20: #{up_block_forward.1} parent=11 // pred_fallthru
          _
      $region12: #{up_block_forward.1} parent=5 // pred_fallthru
        _
      %p299 = scmp.lt.s32.totalorder %s26, 8
      // Predicated region
      $region21: #{up_block_forward.1} parent=5 // pred_check
        %p300 = pneg %p299
      $region22: #{up_block_forward.1} parent=5 // pred_check_branch
        %302 = sbr.rel (%p300) target = $region24
      $region23: #{up_block_forward.1} parent=5 // pred_region
        // Predicated region
        $region25: #{up_block_forward.1} parent=23 // pred_check
          %p303 = pneg %p60
        $region26: #{up_block_forward.1} parent=23 // pred_check_branch
          %305 = sbr.rel (%p303) target = $region28
        $region27: #{up_block_forward.1} parent=23 // pred_region
          %s306 = sand.u32 %s50, 1
          %s307 = scalar_lea.sflag [#allocation5], %s306
          %s308 = sand.u32 %s50, 1
          %s309 = smul.addr %s308, 64
          %s310 = scalar_lea.vmem [#allocation4], %s309
          %s311 = smul.u32 4, %s34
          %s313 = ssub.s32 1024, 1024
          %314 = vsyncadd %s307, %s313
          %s315 = smul.addr %s311, 2
          %s316 = smul.addr %s33, 32
          %s317 = sadd.s32 %s315, %s316
          %s318 = smul.addr %s317, 128
          %s319 = scalar_lea.hbm %s0, %s318
          %s320 = sshll.u32 %s310, 4
          %s321 = int_to_ptr.vmem [resolvable:$true] %s320
          %326 = dma.hbm_to_vmem [thread:$0]  %s319, 1024, %s321, %s307, 128, 128, 8
        $region28: #{up_block_forward.1} parent=23 // pred_fallthru
          _
        // Predicated region
        $region29: #{up_block_forward.1} parent=23 // pred_check
          %p327 = pneg %p96
        $region30: #{up_block_forward.1} parent=23 // pred_check_branch
          %329 = sbr.rel (%p327) target = $region32
        $region31: #{up_block_forward.1} parent=23 // pred_region
          %s330 = sand.u32 %s26, 1
          %s331 = scalar_lea.sflag [#allocation8], %s330
          %s332 = sand.u32 %s86, 1
          %s333 = smul.addr %s332, 16
          %s334 = scalar_lea.vmem [#allocation7], %s333
          %s335 = smul.u32 %s34, 4
          %s336 = ssub.s32 %s335, 1
          %p337 = scmp.gt.s32.totalorder %s336, 0
          %s338 = scalar_select %p337, %s336, 0
          %s340 = ssub.s32 256, 256
          %341 = vsyncadd %s331, %s340
          %s342 = smul.addr %s338, 2
          %s343 = smul.addr %s33, 32
          %s344 = sadd.s32 %s342, %s343
          %s345 = smul.addr %s344, 128
          %s346 = scalar_lea.hbm %s1, %s345
          %s347 = sshll.u32 %s334, 4
          %s348 = int_to_ptr.vmem [resolvable:$true] %s347
          %353 = dma.hbm_to_vmem [thread:$0]  %s346, 256, %s348, %s331, 128, 128, 8
        $region32: #{up_block_forward.1} parent=23 // pred_fallthru
          _
        // Predicated region
        $region33: #{up_block_forward.1} parent=23 // pred_check
          %p354 = pneg %p132
        $region34: #{up_block_forward.1} parent=23 // pred_check_branch
          %356 = sbr.rel (%p354) target = $region36
        $region35: #{up_block_forward.1} parent=23 // pred_region
          %s357 = sand.u32 %s26, 1
          %s358 = scalar_lea.sflag [#allocation8], %s357
          %s359 = sand.u32 %s122, 1
          %s360 = smul.addr %s359, 16
          %s361 = scalar_lea.vmem [#allocation9], %s360
          %s362 = sadd.s32 %s34, 1
          %s363 = smul.u32 %s362, 4
          %p364 = scmp.lt.s32.totalorder %s363, 15
          %s365 = scalar_select %p364, %s363, 15
          %s367 = ssub.s32 256, 256
          %368 = vsyncadd %s358, %s367
          %s369 = smul.addr %s365, 2
          %s370 = smul.addr %s33, 32
          %s371 = sadd.s32 %s369, %s370
          %s372 = smul.addr %s371, 128
          %s373 = scalar_lea.hbm %s2, %s372
          %s374 = sshll.u32 %s361, 4
          %s375 = int_to_ptr.vmem [resolvable:$true] %s374
          %380 = dma.hbm_to_vmem [thread:$0]  %s373, 256, %s375, %s358, 128, 128, 8
        $region36: #{up_block_forward.1} parent=23 // pred_fallthru
          _
        // Predicated region
        $region37: #{up_block_forward.1} parent=23 // pred_check
          %p381 = pneg %p158
        $region38: #{up_block_forward.1} parent=23 // pred_check_branch
          %383 = sbr.rel (%p381) target = $region40
        $region39: #{up_block_forward.1} parent=23 // pred_region
          %s384 = sand.u32 %s26, 1
          %s385 = scalar_lea.sflag [#allocation11], %s384
          %s386 = sand.u32 %s148, 1
          %s387 = scalar_lea.vmem [#allocation10], %s386
          %s389 = ssub.s32 16, 16
          %390 = vsyncadd %s385, %s389
          %s391 = smul.addr %s33, 16
          %s392 = scalar_lea.hbm %s3, %s391
          %s394 = sshll.u32 %s387, 4
          %s395 = int_to_ptr.vmem [resolvable:$true] %s394
          %397 = dma.hbm_to_vmem [thread:$0]  %s392, 16, %s395, %s385
        $region40: #{up_block_forward.1} parent=23 // pred_fallthru
          _
        // Predicated region
        $region41: #{up_block_forward.1} parent=23 // pred_check
          %p398 = pneg %p184
        $region42: #{up_block_forward.1} parent=23 // pred_check_branch
          %400 = sbr.rel (%p398) target = $region44
        $region43: #{up_block_forward.1} parent=23 // pred_region
          %s401 = sand.u32 %s26, 1
          %s402 = scalar_lea.sflag [#allocation11], %s401
          %s403 = sand.u32 %s174, 1
          %s404 = scalar_lea.vmem [#allocation12], %s403
          %s406 = ssub.s32 16, 16
          %407 = vsyncadd %s402, %s406
          %s408 = smul.addr %s33, 16
          %s409 = scalar_lea.hbm %s4, %s408
          %s411 = sshll.u32 %s404, 4
          %s412 = int_to_ptr.vmem [resolvable:$true] %s411
          %414 = dma.hbm_to_vmem [thread:$0]  %s409, 16, %s412, %s402
        $region44: #{up_block_forward.1} parent=23 // pred_fallthru
          _
      $region24: #{up_block_forward.1} parent=5 // pred_fallthru
        _
      %p415 = scmp.le.s32.totalorder 1, %s26
      %p416 = scmp.lt.s32.totalorder %s26, 9
      %p417 = pnand %p415, %p416
      %p418 = pneg %p417
      // Predicated region
      $region45: #{up_block_forward.1} parent=5 // pred_check
        _
      $region46: #{up_block_forward.1} parent=5 // pred_check_branch
        %420 = sbr.rel (%p417) target = $region48
      $region47: #{up_block_forward.1} parent=5 // pred_region
        %s421 = ssub.s32 %s26, 1
        %s422 = sand.u32 %s53, 1
        %s423 = scalar_lea.sflag [#allocation5], %s422
        %s424 = sand.u32 %s53, 1
        %s425 = smul.addr %s424, 64
        %s426 = scalar_lea.vmem [#allocation4], %s425
        // Predicated region
        $region49: #{up_block_forward.1} parent=47 // pred_check
          %p427 = pneg %p66
        $region50: #{up_block_forward.1} parent=47 // pred_check_branch
          %429 = sbr.rel (%p427) target = $region52
        $region51: #{up_block_forward.1} parent=47 // pred_region
          %430 = dma.done %s423, 1024
        $region52: #{up_block_forward.1} parent=47 // pred_fallthru
          _
        %s431 = sand.u32 %s31, 1
        %s432 = scalar_lea.sflag [#allocation8], %s431
        %s433 = sand.u32 %s89, 1
        %s434 = smul.addr %s433, 16
        %s435 = scalar_lea.vmem [#allocation7], %s434
        // Predicated region
        $region53: #{up_block_forward.1} parent=47 // pred_check
          %p436 = pneg %p102
        $region54: #{up_block_forward.1} parent=47 // pred_check_branch
          %438 = sbr.rel (%p436) target = $region56
        $region55: #{up_block_forward.1} parent=47 // pred_region
          %439 = dma.done %s432, 256
        $region56: #{up_block_forward.1} parent=47 // pred_fallthru
          _
        %s440 = sand.u32 %s31, 1
        %s441 = scalar_lea.sflag [#allocation8], %s440
        %s442 = sand.u32 %s125, 1
        %s443 = smul.addr %s442, 16
        %s444 = scalar_lea.vmem [#allocation9], %s443
        // Predicated region
        $region57: #{up_block_forward.1} parent=47 // pred_check
          %p445 = pneg %p138
        $region58: #{up_block_forward.1} parent=47 // pred_check_branch
          %447 = sbr.rel (%p445) target = $region60
        $region59: #{up_block_forward.1} parent=47 // pred_region
          %448 = dma.done %s441, 256
        $region60: #{up_block_forward.1} parent=47 // pred_fallthru
          _
        %s449 = sand.u32 %s31, 1
        %s450 = scalar_lea.sflag [#allocation11], %s449
        %s451 = sand.u32 %s151, 1
        %s452 = scalar_lea.vmem [#allocation10], %s451
        // Predicated region
        $region61: #{up_block_forward.1} parent=47 // pred_check
          %p453 = pneg %p164
        $region62: #{up_block_forward.1} parent=47 // pred_check_branch
          %455 = sbr.rel (%p453) target = $region64
        $region63: #{up_block_forward.1} parent=47 // pred_region
          %456 = dma.done %s450, 16
        $region64: #{up_block_forward.1} parent=47 // pred_fallthru
          _
        %s457 = sand.u32 %s31, 1
        %s458 = scalar_lea.sflag [#allocation11], %s457
        %s459 = sand.u32 %s177, 1
        %s460 = scalar_lea.vmem [#allocation12], %s459
        // Predicated region
        $region65: #{up_block_forward.1} parent=47 // pred_check
          %p461 = pneg %p190
        $region66: #{up_block_forward.1} parent=47 // pred_check_branch
          %463 = sbr.rel (%p461) target = $region68
        $region67: #{up_block_forward.1} parent=47 // pred_region
          %464 = dma.done %s458, 16
        $region68: #{up_block_forward.1} parent=47 // pred_fallthru
          _
        // Predicated region
        $region69: #{up_block_forward.1} parent=47 // pred_check
          %p465 = pneg %p211
        $region70: #{up_block_forward.1} parent=47 // pred_check_branch
          %467 = sbr.rel (%p465) target = $region72
        $region71: #{up_block_forward.1} parent=47 // pred_region
          %468 = dma.done [#allocation14], 640
        $region72: #{up_block_forward.1} parent=47 // pred_fallthru
          _
        // Predicated region
        $region73: #{up_block_forward.1} parent=47 // pred_check
          %p469 = pneg %p232
        $region74: #{up_block_forward.1} parent=47 // pred_check_branch
          %471 = sbr.rel (%p469) target = $region76
        $region75: #{up_block_forward.1} parent=47 // pred_region
          %472 = dma.done [#allocation14], 16
        $region76: #{up_block_forward.1} parent=47 // pred_fallthru
          _
        %s473 = sand.u32 %s53, 1
        %s474 = scalar_lea.sflag [#allocation5], %s473
        %s475 = sand.u32 %s53, 1
        %s476 = smul.addr %s475, 64
        %s477 = scalar_lea.vmem [#allocation4], %s476
        %p478 = pneg %p66
        %p479 = pneg %p63
        %s480 = sand.u32 %s31, 1
        %s481 = scalar_lea.sflag [#allocation8], %s480
        %s482 = sand.u32 %s89, 1
        %s483 = smul.addr %s482, 16
        %s484 = scalar_lea.vmem [#allocation7], %s483
        %p485 = pneg %p102
        %p486 = pneg %p99
        %s487 = sand.u32 %s31, 1
        %s488 = scalar_lea.sflag [#allocation8], %s487
        %s489 = sand.u32 %s125, 1
        %s490 = smul.addr %s489, 16
        %s491 = scalar_lea.vmem [#allocation9], %s490
        %p492 = pneg %p138
        %p493 = pneg %p135
        %s494 = sand.u32 %s31, 1
        %s495 = scalar_lea.sflag [#allocation11], %s494
        %s496 = sand.u32 %s151, 1
        %s497 = scalar_lea.vmem [#allocation10], %s496
        %p498 = pneg %p164
        %p499 = pneg %p161
        %s500 = sand.u32 %s31, 1
        %s501 = scalar_lea.sflag [#allocation11], %s500
        %s502 = sand.u32 %s177, 1
        %s503 = scalar_lea.vmem [#allocation12], %s502
        %p504 = pneg %p190
        %p505 = pneg %p187
        %p506 = pneg %p211
        %p507 = pneg %p208
        %p508 = pneg %p232
        %p509 = pneg %p229
        %p510 = pneg %p260
        %p511 = pneg %p257
        %s512 = sand.u32 %s247, 1
        %s513 = scalar_lea.sflag [#allocation6], %s512
        %s514 = sand.u32 %s247, 1
        %s515 = smul.addr %s514, 64
        %s516 = scalar_lea.vmem [#allocation16], %s515
        %s517 = smul.u32 4, %s36
        %s518 = smul.u32 %s36, 4
        %s519 = ssub.s32 %s518, 1
        %p520 = scmp.gt.s32.totalorder %s519, 0
        %s521 = scalar_select %p520, %s519, 0
        %s522 = sadd.s32 %s36, 1
        %s523 = smul.u32 %s522, 4
        %p524 = scmp.lt.s32.totalorder %s523, 15
        %s525 = scalar_select %p524, %s523, 15
        %s526 = smul.u32 8, %s36
        %v527 = vld [vmem:[%s452] sm:$0x1]
        %v528 = vld [vmem:[%s460] sm:$0x1]
        %vm529 = vcmask 24576
        %530 = vst.msk [vmem:[#allocation2] sm:$0x1] %vm529, 0.0
        %531 = vst.msk [vmem:[#allocation2 + $0x18] sm:$0x1] %vm529, 0.0
        %532 = vst.msk [vmem:[#allocation2 + $0x30] sm:$0x1] %vm529, 0.0
        %533 = vst.msk [vmem:[#allocation2 + $0x48] sm:$0x1] %vm529, 0.0
        %534 = vst.msk [vmem:[#allocation2 + $0x60] sm:$0x1] %vm529, 0.0
        %535 = vst.msk [vmem:[#allocation2 + $0x78] sm:$0x1] %vm529, 0.0
        %536 = vst.msk [vmem:[#allocation2 + $0x11] sm:$0x1] %vm529, 0.0
        %537 = vst.msk [vmem:[#allocation2 + $0x29] sm:$0x1] %vm529, 0.0
        %538 = vst.msk [vmem:[#allocation2 + $0x41] sm:$0x1] %vm529, 0.0
        %539 = vst.msk [vmem:[#allocation2 + $0x59] sm:$0x1] %vm529, 0.0
        %540 = vst.msk [vmem:[#allocation2 + $0x71] sm:$0x1] %vm529, 0.0
        %541 = vst.msk [vmem:[#allocation2 + $0x89] sm:$0x1] %vm529, 0.0
        %v542 = vld [vmem:[%s426] sm:$0xff]
        %v543 = vld [vmem:[%s426 + $0x8] sm:$0xff]
        %v544 = vld [vmem:[%s426 + $0x10] sm:$0xff]
        %v545 = vld [vmem:[%s426 + $0x18] sm:$0xff]
        %v546 = vld [vmem:[%s426 + $0x20] sm:$0xff]
        %v547 = vld [vmem:[%s426 + $0x28] sm:$0xff]
        %v548 = vld [vmem:[%s426 + $0x30] sm:$0xff]
        %v549 = vld [vmem:[%s426 + $0x38] sm:$0xff]
        %v551 = vlaneseq
        %v552 = vshrl.u32 %v551, 7
        %v553 = vsub.s32 0, %v552
        %v554 = vrot.slane %v527, %v553
        %v556 = vmul.f32 %v542, %v554
        %v557 = vmul.f32 %v543, %v554
        %v558 = vmul.f32 %v544, %v554
        %v559 = vmul.f32 %v545, %v554
        %v560 = vmul.f32 %v546, %v554
        %v561 = vmul.f32 %v547, %v554
        %v562 = vmul.f32 %v548, %v554
        %v563 = vmul.f32 %v549, %v554
        %v565 = vlaneseq
        %v566 = vshrl.u32 %v565, 7
        %v567 = vsub.s32 0, %v566
        %v568 = vrot.slane %v528, %v567
        %v570 = vadd.f32 %v556, %v568
        %v571 = vadd.f32 %v557, %v568
        %v572 = vadd.f32 %v558, %v568
        %v573 = vadd.f32 %v559, %v568
        %v574 = vadd.f32 %v560, %v568
        %v575 = vadd.f32 %v561, %v568
        %v576 = vadd.f32 %v562, %v568
        %v577 = vadd.f32 %v563, %v568
        %s578 = scalar_lea.vmem [#allocation2], 24
        %vm579 = vcmask 31744
        %580 = vst.msk [vmem:[%s578 + $0x1] sm:$0xff] %vm579, %v570
        %581 = vst.msk [vmem:[%s578 + $0x9] sm:$0xff] %vm579, %v571
        %582 = vst.msk [vmem:[%s578 + $0x19] sm:$0xff] %vm579, %v572
        %583 = vst.msk [vmem:[%s578 + $0x21] sm:$0xff] %vm579, %v573
        %584 = vst.msk [vmem:[%s578 + $0x31] sm:$0xff] %vm579, %v574
        %585 = vst.msk [vmem:[%s578 + $0x39] sm:$0xff] %vm579, %v575
        %586 = vst.msk [vmem:[%s578 + $0x49] sm:$0xff] %vm579, %v576
        %587 = vst.msk [vmem:[%s578 + $0x51] sm:$0xff] %vm579, %v577
        %p588 = scmp.gt.s32.totalorder %s36, 0
        // Predicated region
        $region77: #{up_block_forward.1} parent=47 // pred_check
          %p589 = pneg %p588
        $region78: #{up_block_forward.1} parent=47 // pred_check_branch
          %591 = sbr.rel (%p589) target = $region80
        $region79: #{up_block_forward.1} parent=47 // pred_region
          %v592 = vld [vmem:[%s435] sm:$0xff]
          %v593 = vld [vmem:[%s435 + $0x8] sm:$0xff]
          %v594 = vmul.f32 %v592, %v554
          %v595 = vmul.f32 %v593, %v554
          %v596 = vadd.f32 %v594, %v568
          %v597 = vadd.f32 %v595, %v568
          %598 = vst.msk [vmem:[#allocation2 + $0x1] sm:$0xff] %vm579, %v596
          %599 = vst.msk [vmem:[#allocation2 + $0x9] sm:$0xff] %vm579, %v597
        $region80: #{up_block_forward.1} parent=47 // pred_fallthru
          _
        %p600 = scmp.eq.s32.totalorder %s36, 0
        // Predicated region
        $region81: #{up_block_forward.1} parent=47 // pred_check
          %p601 = pneg %p600
        $region82: #{up_block_forward.1} parent=47 // pred_check_branch
          %603 = sbr.rel (%p601) target = $region84
        $region83: #{up_block_forward.1} parent=47 // pred_region
          %604 = vst.msk [vmem:[#allocation2 + $0x1] sm:$0xff] %vm579, 0.0
          %605 = vst.msk [vmem:[#allocation2 + $0x9] sm:$0xff] %vm579, 0.0
        $region84: #{up_block_forward.1} parent=47 // pred_fallthru
          _
        %p606 = scmp.lt.s32.totalorder %s36, 3
        // Predicated region
        $region85: #{up_block_forward.1} parent=47 // pred_check
          %p607 = pneg %p606
        $region86: #{up_block_forward.1} parent=47 // pred_check_branch
          %609 = sbr.rel (%p607) target = $region88
        $region87: #{up_block_forward.1} parent=47 // pred_region
          %v610 = vld [vmem:[%s444] sm:$0xff]
          %v611 = vld [vmem:[%s444 + $0x8] sm:$0xff]
          %v612 = vmul.f32 %v610, %v554
          %v613 = vmul.f32 %v611, %v554
          %v614 = vadd.f32 %v612, %v568
          %v615 = vadd.f32 %v613, %v568
          %s616 = scalar_lea.vmem [#allocation2], 120
          %617 = vst.msk [vmem:[%s616 + $0x1] sm:$0xff] %vm579, %v614
          %618 = vst.msk [vmem:[%s616 + $0x9] sm:$0xff] %vm579, %v615
        $region88: #{up_block_forward.1} parent=47 // pred_fallthru
          _
        %p619 = scmp.eq.s32.totalorder %s36, 3
        // Predicated region
        $region89: #{up_block_forward.1} parent=47 // pred_check
          %p620 = pneg %p619
        $region90: #{up_block_forward.1} parent=47 // pred_check_branch
          %622 = sbr.rel (%p620) target = $region92
        $region91: #{up_block_forward.1} parent=47 // pred_region
          %s623 = scalar_lea.vmem [#allocation2], 120
          %624 = vst.msk [vmem:[%s623 + $0x1] sm:$0xff] %vm579, 0.0
          %625 = vst.msk [vmem:[%s623 + $0x9] sm:$0xff] %vm579, 0.0
        $region92: #{up_block_forward.1} parent=47 // pred_fallthru
          _
        %v626 = vld [vmem:[#allocation2] sm:$0xff]
        %v627 = vld [vmem:[#allocation2 + $0x8] sm:$0xff]
        %v628 = vld [vmem:[#allocation2 + $0x18] sm:$0xff]
        %v629 = vld [vmem:[#allocation2 + $0x20] sm:$0xff]
        %v630 = vld [vmem:[#allocation2 + $0x30] sm:$0xff]
        %v631 = vld [vmem:[#allocation2 + $0x38] sm:$0xff]
        %v632 = vld [vmem:[#allocation2 + $0x48] sm:$0xff]
        %v633 = vld [vmem:[#allocation2 + $0x50] sm:$0xff]
        %634 = vst.msk [vmem:[#allocation3] sm:$0xff] %vm579, %v626
        %635 = vst.msk [vmem:[#allocation3 + $0x8] sm:$0xff] %vm579, %v627
        %636 = vst.msk [vmem:[#allocation3 + $0x10] sm:$0xff] %vm579, %v628
        %637 = vst.msk [vmem:[#allocation3 + $0x18] sm:$0xff] %vm579, %v629
        %638 = vst.msk [vmem:[#allocation3 + $0x20] sm:$0xff] %vm579, %v630
        %639 = vst.msk [vmem:[#allocation3 + $0x28] sm:$0xff] %vm579, %v631
        %640 = vst.msk [vmem:[#allocation3 + $0x30] sm:$0xff] %vm579, %v632
        %641 = vst.msk [vmem:[#allocation3 + $0x38] sm:$0xff] %vm579, %v633
        %v642 = vld [vmem:[#allocation2 + $0x1] sm:$0xff]
        %v643 = vld [vmem:[#allocation2 + $0x9] sm:$0xff]
        %v644 = vld [vmem:[#allocation2 + $0x19] sm:$0xff]
        %v645 = vld [vmem:[#allocation2 + $0x21] sm:$0xff]
        %v646 = vld [vmem:[#allocation2 + $0x31] sm:$0xff]
        %v647 = vld [vmem:[#allocation2 + $0x39] sm:$0xff]
        %v648 = vld [vmem:[#allocation2 + $0x49] sm:$0xff]
        %v649 = vld [vmem:[#allocation2 + $0x51] sm:$0xff]
        %658 = vrot.lane.b32.xlu0 %v642, 4
        %v659 = vpop.permute.xlu0 %658
        %660 = vrot.lane.b32.xlu0 %v643, 4
        %v661 = vpop.permute.xlu0 %660
        %662 = vrot.lane.b32.xlu0 %v644, 4
        %v663 = vpop.permute.xlu0 %662
        %664 = vrot.lane.b32.xlu0 %v645, 4
        %v665 = vpop.permute.xlu0 %664
        %666 = vrot.lane.b32.xlu0 %v646, 4
        %v667 = vpop.permute.xlu0 %666
        %668 = vrot.lane.b32.xlu0 %v647, 4
        %v669 = vpop.permute.xlu0 %668
        %670 = vrot.lane.b32.xlu0 %v648, 4
        %v671 = vpop.permute.xlu0 %670
        %672 = vrot.lane.b32.xlu0 %v649, 4
        %v673 = vpop.permute.xlu0 %672
        %vm682 = vcmask 64544
        %683 = vst.msk [vmem:[#allocation3] sm:$0xff] %vm682, %v659
        %684 = vst.msk [vmem:[#allocation3 + $0x8] sm:$0xff] %vm682, %v661
        %685 = vst.msk [vmem:[#allocation3 + $0x10] sm:$0xff] %vm682, %v663
        %686 = vst.msk [vmem:[#allocation3 + $0x18] sm:$0xff] %vm682, %v665
        %687 = vst.msk [vmem:[#allocation3 + $0x20] sm:$0xff] %vm682, %v667
        %688 = vst.msk [vmem:[#allocation3 + $0x28] sm:$0xff] %vm682, %v669
        %689 = vst.msk [vmem:[#allocation3 + $0x30] sm:$0xff] %vm682, %v671
        %690 = vst.msk [vmem:[#allocation3 + $0x38] sm:$0xff] %vm682, %v673
        %v691 = vld [vmem:[#allocation2 + $0x2] sm:$0xff]
        %v692 = vld [vmem:[#allocation2 + $0xa] sm:$0xff]
        %v693 = vld [vmem:[#allocation2 + $0x1a] sm:$0xff]
        %v694 = vld [vmem:[#allocation2 + $0x22] sm:$0xff]
        %v695 = vld [vmem:[#allocation2 + $0x32] sm:$0xff]
        %v696 = vld [vmem:[#allocation2 + $0x3a] sm:$0xff]
        %v697 = vld [vmem:[#allocation2 + $0x4a] sm:$0xff]
        %v698 = vld [vmem:[#allocation2 + $0x52] sm:$0xff]
        %707 = vrot.lane.b32.xlu0 %v691, 8
        %v708 = vpop.permute.xlu0 %707
        %709 = vrot.lane.b32.xlu0 %v692, 8
        %v710 = vpop.permute.xlu0 %709
        %711 = vrot.lane.b32.xlu0 %v693, 8
        %v712 = vpop.permute.xlu0 %711
        %713 = vrot.lane.b32.xlu0 %v694, 8
        %v714 = vpop.permute.xlu0 %713
        %715 = vrot.lane.b32.xlu0 %v695, 8
        %v716 = vpop.permute.xlu0 %715
        %717 = vrot.lane.b32.xlu0 %v696, 8
        %v718 = vpop.permute.xlu0 %717
        %719 = vrot.lane.b32.xlu0 %v697, 8
        %v720 = vpop.permute.xlu0 %719
        %721 = vrot.lane.b32.xlu0 %v698, 8
        %v722 = vpop.permute.xlu0 %721
        %vm731 = vcmask 97344
        %732 = vst.msk [vmem:[#allocation3] sm:$0xff] %vm731, %v708
        %733 = vst.msk [vmem:[#allocation3 + $0x8] sm:$0xff] %vm731, %v710
        %734 = vst.msk [vmem:[#allocation3 + $0x10] sm:$0xff] %vm731, %v712
        %735 = vst.msk [vmem:[#allocation3 + $0x18] sm:$0xff] %vm731, %v714
        %736 = vst.msk [vmem:[#allocation3 + $0x20] sm:$0xff] %vm731, %v716
        %737 = vst.msk [vmem:[#allocation3 + $0x28] sm:$0xff] %vm731, %v718
        %738 = vst.msk [vmem:[#allocation3 + $0x30] sm:$0xff] %vm731, %v720
        %739 = vst.msk [vmem:[#allocation3 + $0x38] sm:$0xff] %vm731, %v722
        %v740 = vld [vmem:[%s578] sm:$0xff]
        %v741 = vld [vmem:[%s578 + $0x8] sm:$0xff]
        %v742 = vld [vmem:[%s578 + $0x18] sm:$0xff]
        %v743 = vld [vmem:[%s578 + $0x20] sm:$0xff]
        %v744 = vld [vmem:[%s578 + $0x30] sm:$0xff]
        %v745 = vld [vmem:[%s578 + $0x38] sm:$0xff]
        %v746 = vld [vmem:[%s578 + $0x48] sm:$0xff]
        %v747 = vld [vmem:[%s578 + $0x50] sm:$0xff]
        %756 = vrot.lane.b32.xlu0 %v740, 12
        %v757 = vpop.permute.xlu0 %756
        %758 = vrot.lane.b32.xlu0 %v741, 12
        %v759 = vpop.permute.xlu0 %758
        %760 = vrot.lane.b32.xlu0 %v742, 12
        %v761 = vpop.permute.xlu0 %760
        %762 = vrot.lane.b32.xlu0 %v743, 12
        %v763 = vpop.permute.xlu0 %762
        %764 = vrot.lane.b32.xlu0 %v744, 12
        %v765 = vpop.permute.xlu0 %764
        %766 = vrot.lane.b32.xlu0 %v745, 12
        %v767 = vpop.permute.xlu0 %766
        %768 = vrot.lane.b32.xlu0 %v746, 12
        %v769 = vpop.permute.xlu0 %768
        %770 = vrot.lane.b32.xlu0 %v747, 12
        %v771 = vpop.permute.xlu0 %770
        %vm780 = vcmask 130144
        %781 = vst.msk [vmem:[#allocation3] sm:$0xff] %vm780, %v757
        %782 = vst.msk [vmem:[#allocation3 + $0x8] sm:$0xff] %vm780, %v759
        %783 = vst.msk [vmem:[#allocation3 + $0x10] sm:$0xff] %vm780, %v761
        %784 = vst.msk [vmem:[#allocation3 + $0x18] sm:$0xff] %vm780, %v763
        %785 = vst.msk [vmem:[#allocation3 + $0x20] sm:$0xff] %vm780, %v765
        %786 = vst.msk [vmem:[#allocation3 + $0x28] sm:$0xff] %vm780, %v767
        %787 = vst.msk [vmem:[#allocation3 + $0x30] sm:$0xff] %vm780, %v769
        %788 = vst.msk [vmem:[#allocation3 + $0x38] sm:$0xff] %vm780, %v771
        %v789 = vld [vmem:[%s578 + $0x1] sm:$0xff]
        %v790 = vld [vmem:[%s578 + $0x9] sm:$0xff]
        %v791 = vld [vmem:[%s578 + $0x19] sm:$0xff]
        %v792 = vld [vmem:[%s578 + $0x21] sm:$0xff]
        %v793 = vld [vmem:[%s578 + $0x31] sm:$0xff]
        %v794 = vld [vmem:[%s578 + $0x39] sm:$0xff]
        %v795 = vld [vmem:[%s578 + $0x49] sm:$0xff]
        %v796 = vld [vmem:[%s578 + $0x51] sm:$0xff]
        %805 = vrot.lane.b32.xlu0 %v789, 16
        %v806 = vpop.permute.xlu0 %805
        %807 = vrot.lane.b32.xlu0 %v790, 16
        %v808 = vpop.permute.xlu0 %807
        %809 = vrot.lane.b32.xlu0 %v791, 16
        %v810 = vpop.permute.xlu0 %809
        %811 = vrot.lane.b32.xlu0 %v792, 16
        %v812 = vpop.permute.xlu0 %811
        %813 = vrot.lane.b32.xlu0 %v793, 16
        %v814 = vpop.permute.xlu0 %813
        %815 = vrot.lane.b32.xlu0 %v794, 16
        %v816 = vpop.permute.xlu0 %815
        %817 = vrot.lane.b32.xlu0 %v795, 16
        %v818 = vpop.permute.xlu0 %817
        %819 = vrot.lane.b32.xlu0 %v796, 16
        %v820 = vpop.permute.xlu0 %819
        %vm829 = vcmask 162944
        %830 = vst.msk [vmem:[#allocation3] sm:$0xff] %vm829, %v806
        %831 = vst.msk [vmem:[#allocation3 + $0x8] sm:$0xff] %vm829, %v808
        %832 = vst.msk [vmem:[#allocation3 + $0x10] sm:$0xff] %vm829, %v810
        %833 = vst.msk [vmem:[#allocation3 + $0x18] sm:$0xff] %vm829, %v812
        %834 = vst.msk [vmem:[#allocation3 + $0x20] sm:$0xff] %vm829, %v814
        %835 = vst.msk [vmem:[#allocation3 + $0x28] sm:$0xff] %vm829, %v816
        %836 = vst.msk [vmem:[#allocation3 + $0x30] sm:$0xff] %vm829, %v818
        %837 = vst.msk [vmem:[#allocation3 + $0x38] sm:$0xff] %vm829, %v820
        %v838 = vld [vmem:[%s578 + $0x2] sm:$0xff]
        %v839 = vld [vmem:[%s578 + $0xa] sm:$0xff]
        %v840 = vld [vmem:[%s578 + $0x1a] sm:$0xff]
        %v841 = vld [vmem:[%s578 + $0x22] sm:$0xff]
        %v842 = vld [vmem:[%s578 + $0x32] sm:$0xff]
        %v843 = vld [vmem:[%s578 + $0x3a] sm:$0xff]
        %v844 = vld [vmem:[%s578 + $0x4a] sm:$0xff]
        %v845 = vld [vmem:[%s578 + $0x52] sm:$0xff]
        %854 = vrot.lane.b32.xlu0 %v838, 20
        %v855 = vpop.permute.xlu0 %854
        %856 = vrot.lane.b32.xlu0 %v839, 20
        %v857 = vpop.permute.xlu0 %856
        %858 = vrot.lane.b32.xlu0 %v840, 20
        %v859 = vpop.permute.xlu0 %858
        %860 = vrot.lane.b32.xlu0 %v841, 20
        %v861 = vpop.permute.xlu0 %860
        %862 = vrot.lane.b32.xlu0 %v842, 20
        %v863 = vpop.permute.xlu0 %862
        %864 = vrot.lane.b32.xlu0 %v843, 20
        %v865 = vpop.permute.xlu0 %864
        %866 = vrot.lane.b32.xlu0 %v844, 20
        %v867 = vpop.permute.xlu0 %866
        %868 = vrot.lane.b32.xlu0 %v845, 20
        %v869 = vpop.permute.xlu0 %868
        %vm878 = vcmask 195744
        %879 = vst.msk [vmem:[#allocation3] sm:$0xff] %vm878, %v855
        %880 = vst.msk [vmem:[#allocation3 + $0x8] sm:$0xff] %vm878, %v857
        %881 = vst.msk [vmem:[#allocation3 + $0x10] sm:$0xff] %vm878, %v859
        %882 = vst.msk [vmem:[#allocation3 + $0x18] sm:$0xff] %vm878, %v861
        %883 = vst.msk [vmem:[#allocation3 + $0x20] sm:$0xff] %vm878, %v863
        %884 = vst.msk [vmem:[#allocation3 + $0x28] sm:$0xff] %vm878, %v865
        %885 = vst.msk [vmem:[#allocation3 + $0x30] sm:$0xff] %vm878, %v867
        %886 = vst.msk [vmem:[#allocation3 + $0x38] sm:$0xff] %vm878, %v869
        %s887 = scalar_lea.vmem [#allocation2], 48
        %v888 = vld [vmem:[%s887] sm:$0xff]
        %v889 = vld [vmem:[%s887 + $0x8] sm:$0xff]
        %v890 = vld [vmem:[%s887 + $0x18] sm:$0xff]
        %v891 = vld [vmem:[%s887 + $0x20] sm:$0xff]
        %v892 = vld [vmem:[%s887 + $0x30] sm:$0xff]
        %v893 = vld [vmem:[%s887 + $0x38] sm:$0xff]
        %v894 = vld [vmem:[%s887 + $0x48] sm:$0xff]
        %v895 = vld [vmem:[%s887 + $0x50] sm:$0xff]
        %904 = vrot.lane.b32.xlu0 %v888, 24
        %v905 = vpop.permute.xlu0 %904
        %906 = vrot.lane.b32.xlu0 %v889, 24
        %v907 = vpop.permute.xlu0 %906
        %908 = vrot.lane.b32.xlu0 %v890, 24
        %v909 = vpop.permute.xlu0 %908
        %910 = vrot.lane.b32.xlu0 %v891, 24
        %v911 = vpop.permute.xlu0 %910
        %912 = vrot.lane.b32.xlu0 %v892, 24
        %v913 = vpop.permute.xlu0 %912
        %914 = vrot.lane.b32.xlu0 %v893, 24
        %v915 = vpop.permute.xlu0 %914
        %916 = vrot.lane.b32.xlu0 %v894, 24
        %v917 = vpop.permute.xlu0 %916
        %918 = vrot.lane.b32.xlu0 %v895, 24
        %v919 = vpop.permute.xlu0 %918
        %vm928 = vcmask 228544
        %929 = vst.msk [vmem:[#allocation3] sm:$0xff] %vm928, %v905
        %930 = vst.msk [vmem:[#allocation3 + $0x8] sm:$0xff] %vm928, %v907
        %931 = vst.msk [vmem:[#allocation3 + $0x10] sm:$0xff] %vm928, %v909
        %932 = vst.msk [vmem:[#allocation3 + $0x18] sm:$0xff] %vm928, %v911
        %933 = vst.msk [vmem:[#allocation3 + $0x20] sm:$0xff] %vm928, %v913
        %934 = vst.msk [vmem:[#allocation3 + $0x28] sm:$0xff] %vm928, %v915
        %935 = vst.msk [vmem:[#allocation3 + $0x30] sm:$0xff] %vm928, %v917
        %936 = vst.msk [vmem:[#allocation3 + $0x38] sm:$0xff] %vm928, %v919
        %v937 = vld [vmem:[%s887 + $0x1] sm:$0xff]
        %v938 = vld [vmem:[%s887 + $0x9] sm:$0xff]
        %v939 = vld [vmem:[%s887 + $0x19] sm:$0xff]
        %v940 = vld [vmem:[%s887 + $0x21] sm:$0xff]
        %v941 = vld [vmem:[%s887 + $0x31] sm:$0xff]
        %v942 = vld [vmem:[%s887 + $0x39] sm:$0xff]
        %v943 = vld [vmem:[%s887 + $0x49] sm:$0xff]
        %v944 = vld [vmem:[%s887 + $0x51] sm:$0xff]
        %953 = vrot.lane.b32.xlu0 %v937, 28
        %v954 = vpop.permute.xlu0 %953
        %955 = vrot.lane.b32.xlu0 %v938, 28
        %v956 = vpop.permute.xlu0 %955
        %957 = vrot.lane.b32.xlu0 %v939, 28
        %v958 = vpop.permute.xlu0 %957
        %959 = vrot.lane.b32.xlu0 %v940, 28
        %v960 = vpop.permute.xlu0 %959
        %961 = vrot.lane.b32.xlu0 %v941, 28
        %v962 = vpop.permute.xlu0 %961
        %963 = vrot.lane.b32.xlu0 %v942, 28
        %v964 = vpop.permute.xlu0 %963
        %965 = vrot.lane.b32.xlu0 %v943, 28
        %v966 = vpop.permute.xlu0 %965
        %967 = vrot.lane.b32.xlu0 %v944, 28
        %v968 = vpop.permute.xlu0 %967
        %vm977 = vcmask 261344
        %978 = vst.msk [vmem:[#allocation3] sm:$0xff] %vm977, %v954
        %979 = vst.msk [vmem:[#allocation3 + $0x8] sm:$0xff] %vm977, %v956
        %980 = vst.msk [vmem:[#allocation3 + $0x10] sm:$0xff] %vm977, %v958
        %981 = vst.msk [vmem:[#allocation3 + $0x18] sm:$0xff] %vm977, %v960
        %982 = vst.msk [vmem:[#allocation3 + $0x20] sm:$0xff] %vm977, %v962
        %983 = vst.msk [vmem:[#allocation3 + $0x28] sm:$0xff] %vm977, %v964
        %984 = vst.msk [vmem:[#allocation3 + $0x30] sm:$0xff] %vm977, %v966
        %985 = vst.msk [vmem:[#allocation3 + $0x38] sm:$0xff] %vm977, %v968
        %v986 = vld [vmem:[%s887 + $0x2] sm:$0xff]
        %v987 = vld [vmem:[%s887 + $0xa] sm:$0xff]
        %v988 = vld [vmem:[%s887 + $0x1a] sm:$0xff]
        %v989 = vld [vmem:[%s887 + $0x22] sm:$0xff]
        %v990 = vld [vmem:[%s887 + $0x32] sm:$0xff]
        %v991 = vld [vmem:[%s887 + $0x3a] sm:$0xff]
        %v992 = vld [vmem:[%s887 + $0x4a] sm:$0xff]
        %v993 = vld [vmem:[%s887 + $0x52] sm:$0xff]
        %1002 = vrot.lane.b32.xlu0 %v986, 32
        %v1003 = vpop.permute.xlu0 %1002
        %1004 = vrot.lane.b32.xlu0 %v987, 32
        %v1005 = vpop.permute.xlu0 %1004
        %1006 = vrot.lane.b32.xlu0 %v988, 32
        %v1007 = vpop.permute.xlu0 %1006
        %1008 = vrot.lane.b32.xlu0 %v989, 32
        %v1009 = vpop.permute.xlu0 %1008
        %1010 = vrot.lane.b32.xlu0 %v990, 32
        %v1011 = vpop.permute.xlu0 %1010
        %1012 = vrot.lane.b32.xlu0 %v991, 32
        %v1013 = vpop.permute.xlu0 %1012
        %1014 = vrot.lane.b32.xlu0 %v992, 32
        %v1015 = vpop.permute.xlu0 %1014
        %1016 = vrot.lane.b32.xlu0 %v993, 32
        %v1017 = vpop.permute.xlu0 %1016
        %vm1026 = vcmask 294144
        %1027 = vst.msk [vmem:[#allocation3] sm:$0xff] %vm1026, %v1003
        %1028 = vst.msk [vmem:[#allocation3 + $0x8] sm:$0xff] %vm1026, %v1005
        %1029 = vst.msk [vmem:[#allocation3 + $0x10] sm:$0xff] %vm1026, %v1007
        %1030 = vst.msk [vmem:[#allocation3 + $0x18] sm:$0xff] %vm1026, %v1009
        %1031 = vst.msk [vmem:[#allocation3 + $0x20] sm:$0xff] %vm1026, %v1011
        %1032 = vst.msk [vmem:[#allocation3 + $0x28] sm:$0xff] %vm1026, %v1013
        %1033 = vst.msk [vmem:[#allocation3 + $0x30] sm:$0xff] %vm1026, %v1015
        %1034 = vst.msk [vmem:[#allocation3 + $0x38] sm:$0xff] %vm1026, %v1017
        %v1035 = vld [vmem:[#allocation3] sm:$0xff]
        %v1036 = vld [vmem:[#allocation3 + $0x8] sm:$0xff]
        %v1037 = vld [vmem:[#allocation3 + $0x10] sm:$0xff]
        %v1038 = vld [vmem:[#allocation3 + $0x18] sm:$0xff]
        %v1039 = vld [vmem:[#allocation3 + $0x20] sm:$0xff]
        %v1040 = vld [vmem:[#allocation3 + $0x28] sm:$0xff]
        %v1041 = vld [vmem:[#allocation3 + $0x30] sm:$0xff]
        %v1042 = vld [vmem:[#allocation3 + $0x38] sm:$0xff]
        %v1043 = vld [vmem:[#allocation13] sm:$0xff]
        %v1044 = vld [vmem:[#allocation13 + $0x8] sm:$0xff]
        %v1045 = vld [vmem:[#allocation13 + $0x10] sm:$0xff]
        %v1046 = vld [vmem:[#allocation13 + $0x18] sm:$0xff]
        %v1047 = vld [vmem:[#allocation13 + $0x20] sm:$0xf]
        %v1048 = vld [vmem:[#allocation15] sm:$0x1]
        %v1050 = vlaneseq
        %v1051 = vshrl.u32 %v1050, 7
        %v1052 = vsub.s32 0, %v1051
        %v1053 = vrot.slane %v1048, %v1052
        %vm1055 = vcmask 293888
        %v1057 = vsel %vm1055, %v1035, 0
        %v1060 = vsel %vm1055, %v1036, 0
        %v1063 = vsel %vm1055, %v1037, 0
        %v1066 = vsel %vm1055, %v1038, 0
        %v1069 = vsel %vm1055, %v1039, 0
        %v1072 = vsel %vm1055, %v1040, 0
        %v1075 = vsel %vm1055, %v1041, 0
        %v1078 = vsel %vm1055, %v1042, 0
        %vm1080 = vcmask 1043456
        %v1082 = vsel %vm1080, %v1047, 0
        %1084 = vmatprep.subr.mxu0 0.0
        %1085 = vmatpush1.msra.mxu0 %v1043
        %1086 = vmatprep.subr.mxu0 0.0
        %1087 = vmatpush1.msra.mxu0 %v1044
        %1088 = vmatprep.subr.mxu0 0.0
        %1089 = vmatpush1.msra.mxu0 %v1045
        %1090 = vmatprep.subr.mxu0 0.0
        %1091 = vmatpush1.msra.mxu0 %v1046
        %1092 = vmatprep.subr.mxu0 0.0
        %1093 = vmatpush1.msra.mxu0 %v1082
        %1094 = vmatprep.subr.mxu0 0.0
        %1095 = vmatpush1.msra.mxu0 0.0
        %1096 = vmatprep.subr.mxu0 0.0
        %1097 = vmatpush1.msra.mxu0 0.0
        %1098 = vmatprep.subr.mxu0 0.0
        %1099 = vmatpush1.msra.mxu0 0.0
        %1100 = vmatprep.subr.mxu0 0.0
        %1101 = vmatpush1.msra.mxu0 0.0
        %1102 = vmatprep.subr.mxu0 0.0
        %1103 = vmatpush1.msra.mxu0 0.0
        %1104 = vmatprep.subr.mxu0 0.0
        %1105 = vmatpush1.msra.mxu0 0.0
        %1106 = vmatprep.subr.mxu0 0.0
        %1107 = vmatpush1.msra.mxu0 0.0
        %1108 = vmatprep.subr.mxu0 0.0
        %1109 = vmatpush1.msra.mxu0 0.0
        %1110 = vmatprep.subr.mxu0 0.0
        %1111 = vmatpush1.msra.mxu0 0.0
        %1112 = vmatprep.subr.mxu0 0.0
        %1113 = vmatpush1.msra.mxu0 0.0
        %1114 = vmatprep.subr.mxu0 0.0
        %1115 = vmatpush1.msra.mxu0 0.0
        %1116 = vmatprep.subr.mxu0 0.0
        %1117 = vmatpush1.msra.mxu0 0.0
        %1118 = vmatprep.subr.mxu0 0.0
        %1119 = vmatpush1.msra.mxu0 0.0
        %1120 = vmatprep.subr.mxu0 0.0
        %1121 = vmatpush1.msra.mxu0 0.0
        %1122 = vmatprep.subr.mxu0 0.0
        %1123 = vmatpush1.msra.mxu0 0.0
        %1124 = vmatprep.subr.mxu0 0.0
        %1125 = vmatpush1.msra.mxu0 0.0
        %1126 = vmatprep.subr.mxu0 0.0
        %1127 = vmatpush1.msra.mxu0 0.0
        %1128 = vmatprep.subr.mxu0 0.0
        %1129 = vmatpush1.msra.mxu0 0.0
        %1130 = vmatprep.subr.mxu0 0.0
        %1131 = vmatpush1.msra.mxu0 0.0
        %1132 = vmatprep.subr.mxu0 0.0
        %1133 = vmatpush1.msra.mxu0 0.0
        %1134 = vmatprep.subr.mxu0 0.0
        %1135 = vmatpush1.msra.mxu0 0.0
        %1136 = vmatprep.subr.mxu0 0.0
        %1137 = vmatpush1.msra.mxu0 0.0
        %1138 = vmatprep.subr.mxu0 0.0
        %1139 = vmatpush1.msra.mxu0 0.0
        %1140 = vmatprep.subr.mxu0 0.0
        %1141 = vmatpush1.msra.mxu0 0.0
        %1142 = vmatprep.subr.mxu0 0.0
        %1143 = vmatpush1.msra.mxu0 0.0
        %1144 = vmatprep.subr.mxu0 0.0
        %1145 = vmatpush1.msra.mxu0 0.0
        %1146 = vmatprep.subr.mxu0 0.0
        %1147 = vmatpush1.msra.mxu0 0.0
        %1148 = vmatprep.mubr.f32.mxu0 0.0
        %1149 = vmatmul.mubr.f32.gmra.mrb[0].mxu0 %v1057
        %v1150 = vpop.f32.mrb[0].mxu0
        %v1151 = vadd.f32 %v1053, %v1150
        %v1152 = vpop.f32.mrb[0].mxu0
        %1153 = vmatprep.mubr.f32.mxu0 0.0
        %1154 = vmatmul.mubr.f32.gmra.mrb[0].mxu0 %v1060
        %v1155 = vpop.f32.mrb[0].mxu0
        %v1156 = vadd.f32 %v1053, %v1155
        %v1157 = vpop.f32.mrb[0].mxu0
        %1158 = vmatprep.mubr.f32.mxu0 0.0
        %1159 = vmatmul.mubr.f32.gmra.mrb[0].mxu0 %v1063
        %v1160 = vpop.f32.mrb[0].mxu0
        %v1161 = vadd.f32 %v1053, %v1160
        %v1162 = vpop.f32.mrb[0].mxu0
        %1163 = vmatprep.mubr.f32.mxu0 0.0
        %1164 = vmatmul.mubr.f32.gmra.mrb[0].mxu0 %v1066
        %v1165 = vpop.f32.mrb[0].mxu0
        %v1166 = vadd.f32 %v1053, %v1165
        %v1167 = vpop.f32.mrb[0].mxu0
        %1168 = vmatprep.mubr.f32.mxu0 0.0
        %1169 = vmatmul.mubr.f32.gmra.mrb[0].mxu0 %v1069
        %v1170 = vpop.f32.mrb[0].mxu0
        %v1171 = vadd.f32 %v1053, %v1170
        %v1172 = vpop.f32.mrb[0].mxu0
        %1173 = vmatprep.mubr.f32.mxu0 0.0
        %1174 = vmatmul.mubr.f32.gmra.mrb[0].mxu0 %v1072
        %v1175 = vpop.f32.mrb[0].mxu0
        %v1176 = vadd.f32 %v1053, %v1175
        %v1177 = vpop.f32.mrb[0].mxu0
        %1178 = vmatprep.mubr.f32.mxu0 0.0
        %1179 = vmatmul.mubr.f32.gmra.mrb[0].mxu0 %v1075
        %v1180 = vpop.f32.mrb[0].mxu0
        %v1181 = vadd.f32 %v1053, %v1180
        %v1182 = vpop.f32.mrb[0].mxu0
        %1183 = vmatprep.mubr.f32.mxu0 0.0
        %1184 = vmatmul.mubr.f32.gmra.mrb[0].mxu0 %v1078
        %v1185 = vpop.f32.mrb[0].mxu0
        %v1186 = vadd.f32 %v1053, %v1185
        %v1187 = vpop.f32.mrb[0].mxu0
        %1188 = vdwg.mxu0
        %vm1189 = vcmask 261120
        %1190 = vst.msk [vmem:[%s516] sm:$0xff] %vm1189, %v1151
        %1191 = vst.msk [vmem:[%s516 + $0x8] sm:$0xff] %vm1189, %v1156
        %1192 = vst.msk [vmem:[%s516 + $0x10] sm:$0xff] %vm1189, %v1161
        %1193 = vst.msk [vmem:[%s516 + $0x18] sm:$0xff] %vm1189, %v1166
        %1194 = vst.msk [vmem:[%s516 + $0x20] sm:$0xff] %vm1189, %v1171
        %1195 = vst.msk [vmem:[%s516 + $0x28] sm:$0xff] %vm1189, %v1176
        %1196 = vst.msk [vmem:[%s516 + $0x30] sm:$0xff] %vm1189, %v1181
        %1197 = vst.msk [vmem:[%s516 + $0x38] sm:$0xff] %vm1189, %v1186
        %s1198 = sand.u32 %s247, 1
        %s1199 = scalar_lea.sflag [#allocation6], %s1198
        %s1200 = sand.u32 %s247, 1
        %s1201 = smul.addr %s1200, 64
        %s1202 = scalar_lea.vmem [#allocation16], %s1201
        // Predicated region
        $region93: #{up_block_forward.1} parent=47 // pred_check
          %p1203 = pneg %p257
        $region94: #{up_block_forward.1} parent=47 // pred_check_branch
          %1205 = sbr.rel (%p1203) target = $region96
        $region95: #{up_block_forward.1} parent=47 // pred_region
          %s1206 = smul.u32 8, %s36
          %s1208 = ssub.s32 1024, 1024
          %1209 = vsyncadd %s1199, %s1208
          %s1210 = smul.addr %s35, 32
          %s1211 = sadd.s32 %s1206, %s1210
          %s1212 = smul.addr %s1211, 128
          %s1213 = scalar_lea.hbm %s7, %s1212
          %s1214 = sshll.u32 %s1202, 4
          %s1215 = int_to_ptr.vmem [resolvable:$true] %s1214
          %1220 = dma.vmem_to_hbm [thread:$0]  %s1215, 1024, %s1213, %s1199, 128, 128, 8
        $region96: #{up_block_forward.1} parent=47 // pred_fallthru
          _
      $region48: #{up_block_forward.1} parent=5 // pred_fallthru
        _
      %p1221 = scmp.le.s32.totalorder 2, %s26
      // Predicated region
      $region97: #{up_block_forward.1} parent=5 // pred_check
        %p1222 = pneg %p1221
      $region98: #{up_block_forward.1} parent=5 // pred_check_branch
        %1224 = sbr.rel (%p1222) target = $region100
      $region99: #{up_block_forward.1} parent=5 // pred_region
        %s1225 = ssub.s32 %s26, 2
        // Predicated region
        $region101: #{up_block_forward.1} parent=99 // pred_check
          %p1226 = pneg %p263
        $region102: #{up_block_forward.1} parent=99 // pred_check_branch
          %1228 = sbr.rel (%p1226) target = $region104
        $region103: #{up_block_forward.1} parent=99 // pred_region
          %s1229 = sand.u32 %s248, 1
          %s1230 = scalar_lea.sflag [#allocation6], %s1229
          %s1231 = sand.u32 %s248, 1
          %s1232 = smul.addr %s1231, 64
          %s1233 = scalar_lea.vmem [#allocation16], %s1232
          %1234 = dma.done %s1230, 1024
        $region104: #{up_block_forward.1} parent=99 // pred_fallthru
          _
      $region100: #{up_block_forward.1} parent=5 // pred_fallthru
        _
    $region6: #{up_block_forward.1} parent=1 // loop_footer
      %s30 = sadd.s32 1, %s26
    $region7: #{up_block_forward.1} parent=1 // loop_footer_branch
      %25 = sbr.rel target = $region3
    $region8: #{up_block_forward.1} parent=1 // loop_exit
      _
    %1235 = vsyncpa [#allocation5], 1
    %s1236 = scalar_lea.sflag [#allocation5], 1
    %1237 = vsyncpa %s1236, 1
    %1238 = vsyncpa [#allocation8], 1
    %s1239 = scalar_lea.sflag [#allocation8], 1
    %1240 = vsyncpa %s1239, 1
    %1241 = vsyncpa [#allocation11], 1
    %s1242 = scalar_lea.sflag [#allocation11], 1
    %1243 = vsyncpa %s1242, 1
    %1244 = vsyncpa [#allocation14], 1
    %1245 = vsyncpa [#allocation6], 1
    %s1246 = scalar_lea.sflag [#allocation6], 1
    %1247 = vsyncpa %s1246, 1

</llo_original>
